<compile_context>
chip_gen: v6e
topology: v6e:2x2x1
jax: 0.10.0
libtpu: 0.0.40
codegen_flags: <defaults>
</compile_context>

<pallas_src>
import jax
import jax.numpy as jnp
from jax.experimental import pallas as pl
from jax.experimental.pallas import tpu as pltpu


def scse_kernel(x_ref, w1t_ref, b1_ref, w2t_ref, b2_ref, wkt_ref, mask_ref,
                bk_ref, o_ref):
    x = x_ref[...]                                  # (B, C, L), kept in I/O dtype
    B, C, L = x.shape
    f32 = jnp.float32

    # ---------------- cSE branch (tiny tensors, f32 math) ----------------
    # AdaptiveAvgPool1d(1): mean over length -> (B, C), accumulated in f32.
    pooled = jnp.mean(x, axis=2, dtype=f32)                                   # (B, C)
    # Conv1d(C, mid, 1) == (B,C) @ (C,mid) + b1 ; ReLU
    h = jnp.dot(pooled, w1t_ref[...], preferred_element_type=f32) + b1_ref[...]
    h = jnp.maximum(h, 0.0)                                                   # (B, mid)
    # Conv1d(mid, C, 1) == (B,mid) @ (mid,C) + b2 ; Sigmoid
    cse = jnp.dot(h, w2t_ref[...], preferred_element_type=f32) + b2_ref[...]
    cse = jax.nn.sigmoid(cse).astype(x.dtype)                                 # (B, C)

    # ---------------- sSE branch ----------------
    # Conv1d(C -> 1, kernel=3, padding=1, zeros).
    #   proj[b, j, l] = sum_c wk[c, j] * x[b, c, l]   (batched MXU contraction)
    wkt_b = jnp.broadcast_to(wkt_ref[...].astype(x.dtype), (B, 3, C))         # (B, 3, C)
    proj = jnp.einsum('bjc,bcl->bjl', wkt_b, x,
                      preferred_element_type=f32)                             # (B, 3, L)
    m = mask_ref[...]                                                         # (2, L) f32
    # tap j=0 contributes proj0[l-1]  (zeroed at l = 0)
    left = pltpu.roll(proj[:, 0, :], shift=1, axis=1) * m[0]
    # tap j=1 contributes proj1[l]
    center = proj[:, 1, :]
    # tap j=2 contributes proj2[l+1]  (zeroed at l = L-1); roll by L-1 == shift -1
    right = pltpu.roll(proj[:, 2, :], shift=L - 1, axis=1) * m[1]
    sse = jax.nn.sigmoid(left + center + right + bk_ref[0]).astype(x.dtype)   # (B, L)

    # ---------------- fuse: y = x * (cse + sse), all in I/O dtype ----------------
    gate = cse[:, :, None] + sse[:, None, :]                                  # (B, C, L)
    o_ref[...] = (x * gate).astype(o_ref.dtype)


# Generation-aware tile / VMEM budgets (bytes).
_GEN_TILE_TARGET = {"v5e": 3 << 20, "v6e": 4 << 20, "v7x": 7 << 20}
_GEN_VMEM_LIMIT = {"v5e": 64 << 20, "v6e": 64 << 20, "v7x": 48 << 20}


def _tpu_generation():
    try:
        kind = jax.devices()[0].device_kind.lower()
    except Exception:
        return "unknown"
    if "v6" in kind:
        return "v6e"
    if "v7" in kind or "7x" in kind:
        return "v7x"
    if "v5" in kind and ("lite" in kind or "5e" in kind):
        return "v5e"
    return "unknown"


def _choose_b_tile(N, C, L, itemsize, generation):
    """Largest divisor of N whose (b, C, L) x-slab stays near the per-generation
    target.  Only v7x (2 TensorCores) caps the slab to keep >= 2 (preferably an
    even number of) grid steps; single-TC chips take the biggest slab that fits."""
    target = _GEN_TILE_TARGET.get(generation, 2 << 20)
    cap = min(N, max(1, target // max(1, C * L * itemsize)))
    if generation == "v7x" and N >= 2:
        cap = min(cap, max(1, N // 2))
    divisors = [b for b in range(1, cap + 1) if N % b == 0]
    if not divisors:
        return 1
    if generation == "v7x":
        even = [b for b in divisors if (N // b) % 2 == 0]
        if even:
            return max(even)
    return max(divisors)


def scse_pallas(x, w1, b1, w2, b2, wk, bk, *, b_tile=None):
    """x: (N, C, L); w1: (mid, C); b1: (mid,); w2: (C, mid); b2: (C,);
    wk: (C, 3) (Conv1d(C,1,3) weight squeezed); bk: (1,)."""
    N, C, L = x.shape
    mid = w1.shape[0]
    gen = _tpu_generation()
    itemsize = x.dtype.itemsize
    if b_tile is None:
        b_tile = _choose_b_tile(N, C, L, itemsize, gen)
    assert N % b_tile == 0, "b_tile must divide the batch"
    grid = (N // b_tile,)

    # Glue-side parameter reshapes / transposes (tiny, one-time).
    w1t = jnp.asarray(w1.T, jnp.float32)                  # (C, mid)
    w2t = jnp.asarray(w2.T, jnp.float32)                  # (mid, C)
    wkt = jnp.asarray(wk.T, jnp.float32)                  # (3, C)
    b1r = jnp.asarray(b1, jnp.float32).reshape(1, mid)
    b2r = jnp.asarray(b2, jnp.float32).reshape(1, C)
    bkr = jnp.asarray(bk, jnp.float32).reshape(1,)        # scalar -> SMEM

    # Boundary masks for the k=3 / pad=1 zero-padded conv (row 0: zero lane 0,
    # row 1: zero lane L-1). Precomputed once so the kernel avoids selects.
    lane = jnp.arange(L)
    masks = jnp.stack([lane >= 1, lane <= L - 2], axis=0).astype(jnp.float32)  # (2, L)

    # Advisory cost: pure HBM streaming (read x, write y) + small matmuls/sigmoids.
    cost = pl.CostEstimate(
        flops=int(9 * N * C * L),
        transcendentals=int(N * (C + L)),
        bytes_accessed=int(2 * N * C * L * itemsize),
    )

    cp_kwargs = dict(dimension_semantics=("parallel",))
    vmem_limit = _GEN_VMEM_LIMIT.get(gen)
    if vmem_limit is not None:
        cp_kwargs["vmem_limit_bytes"] = int(vmem_limit)

    full2 = lambda n: (0, 0)
    return pl.pallas_call(
        scse_kernel,
        out_shape=jax.ShapeDtypeStruct((N, C, L), x.dtype),
        grid_spec=pltpu.PrefetchScalarGridSpec(
            num_scalar_prefetch=0,
            grid=grid,
            in_specs=[
                pl.BlockSpec((b_tile, C, L), lambda n: (n, 0, 0)),   # x slab
                pl.BlockSpec((C, mid), full2),                       # w1^T
                pl.BlockSpec((1, mid), full2),                       # b1
                pl.BlockSpec((mid, C), full2),                       # w2^T
                pl.BlockSpec((1, C), full2),                         # b2
                pl.BlockSpec((3, C), full2),                         # wk^T
                pl.BlockSpec((2, L), full2),                         # boundary masks
                pl.BlockSpec(memory_space=pltpu.MemorySpace.SMEM),   # bk scalar
            ],
            out_specs=pl.BlockSpec((b_tile, C, L), lambda n: (n, 0, 0)),
        ),
        compiler_params=pltpu.CompilerParams(**cp_kwargs),
        cost_estimate=cost,
    )(x, w1t, b1r, w2t, b2r, wkt, masks, bkr)


def scse_reference(x, w1, b1, w2, b2, wk, bk):
    # Pure-JAX reference matching PyTorch semantics.
    N, C, L = x.shape
    pooled = x.mean(axis=2, keepdims=True)                                   # (N, C, 1)
    h = jax.nn.relu(jnp.einsum('mc,ncl->nml', w1, pooled) + b1[None, :, None])
    cse = jax.nn.sigmoid(jnp.einsum('cm,nml->ncl', w2, h) + b2[None, :, None])
    xp = jnp.pad(x, ((0, 0), (0, 0), (1, 1)))                                # zero padding
    sse_pre = sum(jnp.einsum('c,ncl->nl', wk[:, j], xp[:, :, j:j + L]) for j in range(3))
    sse = jax.nn.sigmoid(sse_pre + bk[0])[:, None, :]                        # (N, 1, L)
    return x * cse + x * sse


if __name__ == "__main__":
    N, C, L = 8, 32, 128
    reduction = 16
    mid = C // reduction

    key = jax.random.PRNGKey(0)
    k_x, k_w1, k_b1, k_w2, k_b2, k_wk, k_bk = jax.random.split(key, 7)

    x = jax.random.normal(k_x, (N, C, L), dtype=jnp.float32)
    # cSE params: Conv1d(C, mid, 1) and Conv1d(mid, C, 1) (kernel dim squeezed)
    w1 = jax.random.normal(k_w1, (mid, C), dtype=jnp.float32) * 0.1
    b1 = jax.random.normal(k_b1, (mid,), dtype=jnp.float32) * 0.1
    w2 = jax.random.normal(k_w2, (C, mid), dtype=jnp.float32) * 0.1
    b2 = jax.random.normal(k_b2, (C,), dtype=jnp.float32) * 0.1
    # sSE params: Conv1d(C, 1, k=3) weight (out=1, in=C, k=3) squeezed to (C, 3)
    wk = jax.random.normal(k_wk, (C, 3), dtype=jnp.float32) * 0.1
    bk = jax.random.normal(k_bk, (1,), dtype=jnp.float32) * 0.1

    out = scse_pallas(x, w1, b1, w2, b2, wk, bk)
    out = jax.block_until_ready(out)

    ref = scse_reference(x, w1, b1, w2, b2, wk, bk)
    assert out.shape == (N, C, L)
    assert jnp.allclose(out, ref, rtol=1e-4, atol=1e-5), float(jnp.max(jnp.abs(out - ref)))

    # TODO(synk): args.smpl_attention=True path (SI_MODULE / fuse_net, Conv3d + BN)
    # is a separate module configuration and is not implemented in this kernel.

    print("KERNEL_OK")
</pallas_src>

<mosaic_0001>
module attributes {stable_mosaic.version = 11 : i64} {
  func.func @scse_kernel(%arg0: i32, %arg1: memref<8x32x128xf32, #tpu.memory_space<vmem>>, %arg2: memref<32x2xf32, #tpu.memory_space<vmem>>, %arg3: memref<1x2xf32, #tpu.memory_space<vmem>>, %arg4: memref<2x32xf32, #tpu.memory_space<vmem>>, %arg5: memref<1x32xf32, #tpu.memory_space<vmem>>, %arg6: memref<3x32xf32, #tpu.memory_space<vmem>>, %arg7: memref<2x128xf32, #tpu.memory_space<vmem>>, %arg8: memref<1xf32, #tpu.memory_space<smem>>, %arg9: memref<8x32x128xf32, #tpu.memory_space<vmem>>) attributes {dimension_semantics = [#tpu.dimension_semantics<parallel>], iteration_bounds = array<i64: 1>, scalar_prefetch = 0 : i64, scratch_operands = 0 : i64, tpu.core_type = #tpu.core_type<tc>, window_params = [{transform_indices = @transform_0, window_bounds = array<i64: 8, 32, 128>}, {pipeline_mode = #tpu.pipeline_mode<synchronous>, transform_indices = @transform_1, window_bounds = array<i64: 32, 2>}, {pipeline_mode = #tpu.pipeline_mode<synchronous>, transform_indices = @transform_2, window_bounds = array<i64: 1, 2>}, {pipeline_mode = #tpu.pipeline_mode<synchronous>, transform_indices = @transform_3, window_bounds = array<i64: 2, 32>}, {pipeline_mode = #tpu.pipeline_mode<synchronous>, transform_indices = @transform_4, window_bounds = array<i64: 1, 32>}, {pipeline_mode = #tpu.pipeline_mode<synchronous>, transform_indices = @transform_5, window_bounds = array<i64: 3, 32>}, {pipeline_mode = #tpu.pipeline_mode<synchronous>, transform_indices = @transform_6, window_bounds = array<i64: 2, 128>}, {transform_indices = @transform_7, window_bounds = array<i64: 1>}, {transform_indices = @transform_8, window_bounds = array<i64: 8, 32, 128>}]} {
    %c0 = arith.constant 0 : index
    %c0_0 = arith.constant 0 : index
    %c0_1 = arith.constant 0 : index
    %0 = vector.load %arg1[%c0, %c0_0, %c0_1] : memref<8x32x128xf32, #tpu.memory_space<vmem>>, vector<8x32x128xf32>
    %cst = arith.constant dense<0.000000e+00> : vector<8x32xf32>
    %1 = vector.multi_reduction <add>, %0, %cst [2] : vector<8x32x128xf32> to vector<8x32xf32>
    %cst_2 = arith.constant 1.280000e+02 : f32
    %2 = vector.broadcast %cst_2 : f32 to vector<8x32xf32>
    %3 = arith.divf %1, %2 : vector<8x32xf32>
    %c0_3 = arith.constant 0 : index
    %c0_4 = arith.constant 0 : index
    %4 = vector.load %arg2[%c0_3, %c0_4] : memref<32x2xf32, #tpu.memory_space<vmem>>, vector<32x2xf32>
    %cst_5 = arith.constant dense<0.000000e+00> : vector<8x2xf32>
    %5 = tpu.matmul %3, %4, %cst_5 {dimension_numbers = #tpu.dot_dimension_numbers<[1], [0], [0], [1], [0, 0, 1, 1], [], []>} : vector<8x32xf32>, vector<32x2xf32>, vector<8x2xf32> -> vector<8x2xf32>
    %c0_6 = arith.constant 0 : index
    %c0_7 = arith.constant 0 : index
    %6 = vector.load %arg3[%c0_6, %c0_7] : memref<1x2xf32, #tpu.memory_space<vmem>>, vector<1x2xf32>
    %7 = vector.broadcast %6 : vector<1x2xf32> to vector<8x2xf32>
    %8 = arith.addf %5, %7 : vector<8x2xf32>
    %cst_8 = arith.constant 0.000000e+00 : f32
    %9 = vector.broadcast %cst_8 : f32 to vector<8x2xf32>
    %10 = arith.maximumf %8, %9 : vector<8x2xf32>
    %c0_9 = arith.constant 0 : index
    %c0_10 = arith.constant 0 : index
    %11 = vector.load %arg4[%c0_9, %c0_10] : memref<2x32xf32, #tpu.memory_space<vmem>>, vector<2x32xf32>
    %cst_11 = arith.constant dense<0.000000e+00> : vector<8x32xf32>
    %12 = tpu.matmul %10, %11, %cst_11 {dimension_numbers = #tpu.dot_dimension_numbers<[1], [0], [0], [1], [0, 0, 1, 1], [], []>} : vector<8x2xf32>, vector<2x32xf32>, vector<8x32xf32> -> vector<8x32xf32>
    %c0_12 = arith.constant 0 : index
    %c0_13 = arith.constant 0 : index
    %13 = vector.load %arg5[%c0_12, %c0_13] : memref<1x32xf32, #tpu.memory_space<vmem>>, vector<1x32xf32>
    %14 = vector.broadcast %13 : vector<1x32xf32> to vector<8x32xf32>
    %15 = arith.addf %12, %14 : vector<8x32xf32>
    %16 = arith.negf %15 : vector<8x32xf32>
    %17 = math.exp %16 : vector<8x32xf32>
    %cst_14 = arith.constant 1.000000e+00 : f32
    %18 = vector.broadcast %cst_14 : f32 to vector<8x32xf32>
    %19 = arith.addf %18, %17 : vector<8x32xf32>
    %20 = arith.divf %18, %19 : vector<8x32xf32>
    %c0_15 = arith.constant 0 : index
    %c0_16 = arith.constant 0 : index
    %21 = vector.load %arg6[%c0_15, %c0_16] : memref<3x32xf32, #tpu.memory_space<vmem>>, vector<3x32xf32>
    %22 = vector.shape_cast %21 : vector<3x32xf32> to vector<1x3x32xf32>
    %23 = vector.broadcast %22 : vector<1x3x32xf32> to vector<8x3x32xf32>
    "tpu.trace_start"() <{level = 10 : i32, message = "bjc,bcl->bjl"}> : () -> ()
    %cst_17 = arith.constant dense<0.000000e+00> : vector<8x3x128xf32>
    %24 = tpu.matmul %23, %0, %cst_17 {dimension_numbers = #tpu.dot_dimension_numbers<[2], [1], [1], [2], [0, 0, 0, 1, 1, 2], [0], [0]>} : vector<8x3x32xf32>, vector<8x32x128xf32>, vector<8x3x128xf32> -> vector<8x3x128xf32>
    "tpu.trace_stop"() : () -> ()
    %c0_18 = arith.constant 0 : index
    %c0_19 = arith.constant 0 : index
    %25 = vector.load %arg7[%c0_18, %c0_19] : memref<2x128xf32, #tpu.memory_space<vmem>>, vector<2x128xf32>
    %26 = vector.extract_strided_slice %24 {offsets = [0, 0, 0], sizes = [8, 1, 128], strides = [1, 1, 1]} : vector<8x3x128xf32> to vector<8x1x128xf32>
    %27 = vector.shape_cast %26 : vector<8x1x128xf32> to vector<8x128xf32>
    %c1_i32 = arith.constant 1 : i32
    %28 = tpu.dynamic_rotate %27 by %c1_i32 dim 1 : vector<8x128xf32>, i32 -> vector<8x128xf32>
    %29 = vector.extract_strided_slice %25 {offsets = [0, 0], sizes = [1, 128], strides = [1, 1]} : vector<2x128xf32> to vector<1x128xf32>
    %30 = vector.shape_cast %29 : vector<1x128xf32> to vector<128xf32>
    %31 = vector.shape_cast %30 : vector<128xf32> to vector<1x128xf32>
    %32 = vector.broadcast %31 : vector<1x128xf32> to vector<8x128xf32>
    %33 = arith.mulf %28, %32 : vector<8x128xf32>
    %34 = vector.extract_strided_slice %24 {offsets = [0, 1, 0], sizes = [8, 1, 128], strides = [1, 1, 1]} : vector<8x3x128xf32> to vector<8x1x128xf32>
    %35 = vector.shape_cast %34 : vector<8x1x128xf32> to vector<8x128xf32>
    %36 = vector.extract_strided_slice %24 {offsets = [0, 2, 0], sizes = [8, 1, 128], strides = [1, 1, 1]} : vector<8x3x128xf32> to vector<8x1x128xf32>
    %37 = vector.shape_cast %36 : vector<8x1x128xf32> to vector<8x128xf32>
    %c127_i32 = arith.constant 127 : i32
    %38 = tpu.dynamic_rotate %37 by %c127_i32 dim 1 : vector<8x128xf32>, i32 -> vector<8x128xf32>
    %39 = vector.extract_strided_slice %25 {offsets = [1, 0], sizes = [1, 128], strides = [1, 1]} : vector<2x128xf32> to vector<1x128xf32>
    %40 = vector.shape_cast %39 : vector<1x128xf32> to vector<128xf32>
    %41 = vector.shape_cast %40 : vector<128xf32> to vector<1x128xf32>
    %42 = vector.broadcast %41 : vector<1x128xf32> to vector<8x128xf32>
    %43 = arith.mulf %38, %42 : vector<8x128xf32>
    %44 = arith.addf %33, %35 : vector<8x128xf32>
    %45 = arith.addf %44, %43 : vector<8x128xf32>
    %c0_20 = arith.constant 0 : index
    %46 = memref.load %arg8[%c0_20] : memref<1xf32, #tpu.memory_space<smem>>
    %47 = vector.broadcast %46 : f32 to vector<8x128xf32>
    %48 = arith.addf %45, %47 : vector<8x128xf32>
    %49 = arith.negf %48 : vector<8x128xf32>
    %50 = math.exp %49 : vector<8x128xf32>
    %cst_21 = arith.constant 1.000000e+00 : f32
    %51 = vector.broadcast %cst_21 : f32 to vector<8x128xf32>
    %52 = arith.addf %51, %50 : vector<8x128xf32>
    %53 = arith.divf %51, %52 : vector<8x128xf32>
    %54 = vector.shape_cast %20 : vector<8x32xf32> to vector<8x32x1xf32>
    %55 = vector.shape_cast %53 : vector<8x128xf32> to vector<8x1x128xf32>
    %56 = vector.broadcast %54 : vector<8x32x1xf32> to vector<8x32x128xf32>
    %57 = vector.broadcast %55 : vector<8x1x128xf32> to vector<8x32x128xf32>
    %58 = arith.addf %56, %57 : vector<8x32x128xf32>
    %59 = arith.mulf %0, %58 : vector<8x32x128xf32>
    %c0_22 = arith.constant 0 : index
    %c0_23 = arith.constant 0 : index
    %c0_24 = arith.constant 0 : index
    %60 = vector.load %arg9[%c0_22, %c0_23, %c0_24] : memref<8x32x128xf32, #tpu.memory_space<vmem>>, vector<8x32x128xf32>
    tpu.vector_store %arg9[%c0_22, %c0_23, %c0_24], %59 {strides = array<i32>} : memref<8x32x128xf32, #tpu.memory_space<vmem>>, vector<8x32x128xf32>,
    return
  }
  func.func @transform_0(%arg0: i32) -> (i32, i32, i32) {
    %c0_i32 = arith.constant 0 : i32
    %c0_i32_0 = arith.constant 0 : i32
    %c0_i32_1 = arith.constant 0 : i32
    return %arg0, %c0_i32, %c0_i32_0 : i32, i32, i32
  }
  func.func @transform_1(%arg0: i32) -> (i32, i32) {
    %c0_i32 = arith.constant 0 : i32
    %c0_i32_0 = arith.constant 0 : i32
    %c0_i32_1 = arith.constant 0 : i32
    return %c0_i32, %c0_i32_0 : i32, i32
  }
  func.func @transform_2(%arg0: i32) -> (i32, i32) {
    %c0_i32 = arith.constant 0 : i32
    %c0_i32_0 = arith.constant 0 : i32
    %c0_i32_1 = arith.constant 0 : i32
    return %c0_i32, %c0_i32_0 : i32, i32
  }
  func.func @transform_3(%arg0: i32) -> (i32, i32) {
    %c0_i32 = arith.constant 0 : i32
    %c0_i32_0 = arith.constant 0 : i32
    %c0_i32_1 = arith.constant 0 : i32
    return %c0_i32, %c0_i32_0 : i32, i32
  }
  func.func @transform_4(%arg0: i32) -> (i32, i32) {
    %c0_i32 = arith.constant 0 : i32
    %c0_i32_0 = arith.constant 0 : i32
    %c0_i32_1 = arith.constant 0 : i32
    return %c0_i32, %c0_i32_0 : i32, i32
  }
  func.func @transform_5(%arg0: i32) -> (i32, i32) {
    %c0_i32 = arith.constant 0 : i32
    %c0_i32_0 = arith.constant 0 : i32
    %c0_i32_1 = arith.constant 0 : i32
    return %c0_i32, %c0_i32_0 : i32, i32
  }
  func.func @transform_6(%arg0: i32) -> (i32, i32) {
    %c0_i32 = arith.constant 0 : i32
    %c0_i32_0 = arith.constant 0 : i32
    %c0_i32_1 = arith.constant 0 : i32
    return %c0_i32, %c0_i32_0 : i32, i32
  }
  func.func @transform_7(%arg0: i32) -> i32 {
    %c0_i32 = arith.constant 0 : i32
    %c0_i32_0 = arith.constant 0 : i32
    return %c0_i32 : i32
  }
  func.func @transform_8(%arg0: i32) -> (i32, i32, i32) {
    %c0_i32 = arith.constant 0 : i32
    %c0_i32_0 = arith.constant 0 : i32
    %c0_i32_1 = arith.constant 0 : i32
    return %arg0, %c0_i32, %c0_i32_0 : i32, i32, i32
  }
}

</mosaic_0001>

<llo_original>
// kernel: tpu_custom_call.1
$region0: #{tpu_custom_call.1}
  #allocation0 [shape = 'u32[]', space=smem, size = 0x4, offset = 0x4, fixed_abs, tag = 'smem constant byte address 0x4 - core index']
  #allocation1 [shape = 'u32[144,128]{1,0:T(1,128)}', space=vmem, size = 0x12000, scoped, tag = 'internal scratch']
  #allocation2 [shape = 'f32[1]{0:T(128)S(6)}', space=smem, size = 0x200, scoped, tag = 'scoped memory for tpu_custom_call.1']
  %s0 = inlined_call_operand.hbm [shape: f32[8,32,128], index: 0, kind: input, shape index: {}]
  %s1 = inlined_call_operand.vmem [shape: f32[32,2], index: 1, kind: input, shape index: {}]
  %s2 = inlined_call_operand.vmem [shape: f32[1,2], index: 2, kind: input, shape index: {}]
  %s3 = inlined_call_operand.vmem [shape: f32[2,32], index: 3, kind: input, shape index: {}]
  %s4 = inlined_call_operand.vmem [shape: f32[1,32], index: 4, kind: input, shape index: {}]
  %s5 = inlined_call_operand.vmem [shape: f32[3,32], index: 5, kind: input, shape index: {}]
  %s6 = inlined_call_operand.vmem [shape: f32[2,128], index: 6, kind: input, shape index: {}]
  %s7 = inlined_call_operand.<no memory space> [shape: f32[1], index: 7, kind: input, shape index: {}]
  %s8 = inlined_call_operand.hbm [shape: f32[8,32,128], index: 8, kind: output, shape index: {}]
  %s9 = sld [smem:[#allocation0]]
  $region46: #{tpu_custom_call.1} parent=0
    _
  %s11 = ssub.s32 1, %s9
  %s12 = scalar_select 0, %s11, %s9
  %13 = sst [smem:[#allocation2]] %s7
  $region1: #{tpu_custom_call.1} parent=0
    #allocation3 [shape = 'u8[131072]{0}', space=vmem, size = 0x20000, scoped, tag = 'input window, operand 0, single buffered']
    #allocation4 [shape = 's32[1]{0}', space=sflag, size = 0x4, scoped, tag = 'scoped memory for tpu_custom_call.1']
    #allocation5 [shape = 's32[1]{0}', space=sflag, size = 0x4, scoped, tag = 'scoped memory for tpu_custom_call.1']
    #allocation6 [shape = 'u8[131072]{0}', space=vmem, size = 0x20000, scoped, tag = 'output window, operand 0, single buffered']
    %14 = vsyncpa [#allocation4], 0
    %15 = vsyncpa [#allocation5], 0
    // Predicated region
    $region2: #{tpu_custom_call.1} parent=1 // pred_check
      _
    $region3: #{tpu_custom_call.1} parent=1 // pred_check_branch
      %17 = sbr.rel (0) target = $region5
    $region4: #{tpu_custom_call.1} parent=1 // pred_region
      %s19 = ssub.s32 4096, 4096
      %20 = vsyncadd [#allocation4], %s19
      %s21 = sshll.u32 [#allocation3], 4
      %s22 = int_to_ptr.vmem [resolvable:$true] %s21
      %27 = dma.hbm_to_vmem [thread:$0]  %s0, 4096, %s22, [#allocation4], 128, 128, 8
    $region5: #{tpu_custom_call.1} parent=1 // pred_fallthru
      _
    // Predicated region
    $region6: #{tpu_custom_call.1} parent=1 // pred_check
      _
    $region7: #{tpu_custom_call.1} parent=1 // pred_check_branch
      %29 = sbr.rel (0) target = $region9
    $region8: #{tpu_custom_call.1} parent=1 // pred_region
      _
    $region9: #{tpu_custom_call.1} parent=1 // pred_fallthru
      _
    // Predicated region
    $region10: #{tpu_custom_call.1} parent=1 // pred_check
      _
    $region11: #{tpu_custom_call.1} parent=1 // pred_check_branch
      %31 = sbr.rel (0) target = $region13
    $region12: #{tpu_custom_call.1} parent=1 // pred_region
      _
    $region13: #{tpu_custom_call.1} parent=1 // pred_fallthru
      _
    // Predicated region
    $region14: #{tpu_custom_call.1} parent=1 // pred_check
      _
    $region15: #{tpu_custom_call.1} parent=1 // pred_check_branch
      %33 = sbr.rel (0) target = $region17
    $region16: #{tpu_custom_call.1} parent=1 // pred_region
      _
    $region17: #{tpu_custom_call.1} parent=1 // pred_fallthru
      _
    // Predicated region
    $region18: #{tpu_custom_call.1} parent=1 // pred_check
      _
    $region19: #{tpu_custom_call.1} parent=1 // pred_check_branch
      %35 = sbr.rel (0) target = $region21
    $region20: #{tpu_custom_call.1} parent=1 // pred_region
      _
    $region21: #{tpu_custom_call.1} parent=1 // pred_fallthru
      _
    // Predicated region
    $region22: #{tpu_custom_call.1} parent=1 // pred_check
      _
    $region23: #{tpu_custom_call.1} parent=1 // pred_check_branch
      %37 = sbr.rel (0) target = $region25
    $region24: #{tpu_custom_call.1} parent=1 // pred_region
      _
    $region25: #{tpu_custom_call.1} parent=1 // pred_fallthru
      _
    // Predicated region
    $region26: #{tpu_custom_call.1} parent=1 // pred_check
      _
    $region27: #{tpu_custom_call.1} parent=1 // pred_check_branch
      %39 = sbr.rel (0) target = $region29
    $region28: #{tpu_custom_call.1} parent=1 // pred_region
      _
    $region29: #{tpu_custom_call.1} parent=1 // pred_fallthru
      _
    // Predicated region
    $region30: #{tpu_custom_call.1} parent=1 // pred_check
      _
    $region31: #{tpu_custom_call.1} parent=1 // pred_check_branch
      %41 = sbr.rel (0) target = $region33
    $region32: #{tpu_custom_call.1} parent=1 // pred_region
      _
    $region33: #{tpu_custom_call.1} parent=1 // pred_fallthru
      _
    // Predicated region
    $region34: #{tpu_custom_call.1} parent=1 // pred_check
      _
    $region35: #{tpu_custom_call.1} parent=1 // pred_check_branch
      %43 = sbr.rel (0) target = $region37
    $region36: #{tpu_custom_call.1} parent=1 // pred_region
      %44 = dma.done [#allocation4], 4096
    $region37: #{tpu_custom_call.1} parent=1 // pred_fallthru
      _
    %v45 = vld [vmem:[#allocation3] sm:$0xff]
    %v46 = vld [vmem:[#allocation3 + $0x8] sm:$0xff]
    %v47 = vld [vmem:[#allocation3 + $0x10] sm:$0xff]
    %v48 = vld [vmem:[#allocation3 + $0x18] sm:$0xff]
    %v49 = vld [vmem:[#allocation3 + $0x20] sm:$0xff]
    %v50 = vld [vmem:[#allocation3 + $0x28] sm:$0xff]
    %v51 = vld [vmem:[#allocation3 + $0x30] sm:$0xff]
    %v52 = vld [vmem:[#allocation3 + $0x38] sm:$0xff]
    %v53 = vld [vmem:[#allocation3 + $0x40] sm:$0xff]
    %v54 = vld [vmem:[#allocation3 + $0x48] sm:$0xff]
    %v55 = vld [vmem:[#allocation3 + $0x50] sm:$0xff]
    %v56 = vld [vmem:[#allocation3 + $0x58] sm:$0xff]
    %v57 = vld [vmem:[#allocation3 + $0x60] sm:$0xff]
    %v58 = vld [vmem:[#allocation3 + $0x68] sm:$0xff]
    %v59 = vld [vmem:[#allocation3 + $0x70] sm:$0xff]
    %v60 = vld [vmem:[#allocation3 + $0x78] sm:$0xff]
    %v61 = vld [vmem:[#allocation3 + $0x80] sm:$0xff]
    %v62 = vld [vmem:[#allocation3 + $0x88] sm:$0xff]
    %v63 = vld [vmem:[#allocation3 + $0x90] sm:$0xff]
    %v64 = vld [vmem:[#allocation3 + $0x98] sm:$0xff]
    %v65 = vld [vmem:[#allocation3 + $0xa0] sm:$0xff]
    %v66 = vld [vmem:[#allocation3 + $0xa8] sm:$0xff]
    %v67 = vld [vmem:[#allocation3 + $0xb0] sm:$0xff]
    %v68 = vld [vmem:[#allocation3 + $0xb8] sm:$0xff]
    %v69 = vld [vmem:[#allocation3 + $0xc0] sm:$0xff]
    %v70 = vld [vmem:[#allocation3 + $0xc8] sm:$0xff]
    %v71 = vld [vmem:[#allocation3 + $0xd0] sm:$0xff]
    %v72 = vld [vmem:[#allocation3 + $0xd8] sm:$0xff]
    %v73 = vld [vmem:[#allocation3 + $0xe0] sm:$0xff]
    %v74 = vld [vmem:[#allocation3 + $0xe8] sm:$0xff]
    %v75 = vld [vmem:[#allocation3 + $0xf0] sm:$0xff]
    %v76 = vld [vmem:[#allocation3 + $0xf8] sm:$0xff]
    %77 = vadd.xlane.f32.xlu0 %v45
    %v78 = vpop.xlane.xlu0 %77
    %79 = vadd.xlane.f32.xlu0 %v46
    %v80 = vpop.xlane.xlu0 %79
    %81 = vadd.xlane.f32.xlu0 %v47
    %v82 = vpop.xlane.xlu0 %81
    %83 = vadd.xlane.f32.xlu0 %v48
    %v84 = vpop.xlane.xlu0 %83
    %85 = vadd.xlane.f32.xlu0 %v49
    %v86 = vpop.xlane.xlu0 %85
    %87 = vadd.xlane.f32.xlu0 %v50
    %v88 = vpop.xlane.xlu0 %87
    %89 = vadd.xlane.f32.xlu0 %v51
    %v90 = vpop.xlane.xlu0 %89
    %91 = vadd.xlane.f32.xlu0 %v52
    %v92 = vpop.xlane.xlu0 %91
    %93 = vadd.xlane.f32.xlu0 %v53
    %v94 = vpop.xlane.xlu0 %93
    %95 = vadd.xlane.f32.xlu0 %v54
    %v96 = vpop.xlane.xlu0 %95
    %97 = vadd.xlane.f32.xlu0 %v55
    %v98 = vpop.xlane.xlu0 %97
    %99 = vadd.xlane.f32.xlu0 %v56
    %v100 = vpop.xlane.xlu0 %99
    %101 = vadd.xlane.f32.xlu0 %v57
    %v102 = vpop.xlane.xlu0 %101
    %103 = vadd.xlane.f32.xlu0 %v58
    %v104 = vpop.xlane.xlu0 %103
    %105 = vadd.xlane.f32.xlu0 %v59
    %v106 = vpop.xlane.xlu0 %105
    %107 = vadd.xlane.f32.xlu0 %v60
    %v108 = vpop.xlane.xlu0 %107
    %109 = vadd.xlane.f32.xlu0 %v61
    %v110 = vpop.xlane.xlu0 %109
    %111 = vadd.xlane.f32.xlu0 %v62
    %v112 = vpop.xlane.xlu0 %111
    %113 = vadd.xlane.f32.xlu0 %v63
    %v114 = vpop.xlane.xlu0 %113
    %115 = vadd.xlane.f32.xlu0 %v64
    %v116 = vpop.xlane.xlu0 %115
    %117 = vadd.xlane.f32.xlu0 %v65
    %v118 = vpop.xlane.xlu0 %117
    %119 = vadd.xlane.f32.xlu0 %v66
    %v120 = vpop.xlane.xlu0 %119
    %121 = vadd.xlane.f32.xlu0 %v67
    %v122 = vpop.xlane.xlu0 %121
    %123 = vadd.xlane.f32.xlu0 %v68
    %v124 = vpop.xlane.xlu0 %123
    %125 = vadd.xlane.f32.xlu0 %v69
    %v126 = vpop.xlane.xlu0 %125
    %127 = vadd.xlane.f32.xlu0 %v70
    %v128 = vpop.xlane.xlu0 %127
    %129 = vadd.xlane.f32.xlu0 %v71
    %v130 = vpop.xlane.xlu0 %129
    %131 = vadd.xlane.f32.xlu0 %v72
    %v132 = vpop.xlane.xlu0 %131
    %133 = vadd.xlane.f32.xlu0 %v73
    %v134 = vpop.xlane.xlu0 %133
    %135 = vadd.xlane.f32.xlu0 %v74
    %v136 = vpop.xlane.xlu0 %135
    %137 = vadd.xlane.f32.xlu0 %v75
    %v138 = vpop.xlane.xlu0 %137
    %139 = vadd.xlane.f32.xlu0 %v76
    %v140 = vpop.xlane.xlu0 %139
    %v141 = vrcp.pop 128.0
    %v142 = vmul.f32 %v78, %v141
    %v143 = vmul.f32 %v80, %v141
    %v144 = vmul.f32 %v82, %v141
    %v145 = vmul.f32 %v84, %v141
    %v146 = vmul.f32 %v86, %v141
    %v147 = vmul.f32 %v88, %v141
    %v148 = vmul.f32 %v90, %v141
    %v149 = vmul.f32 %v92, %v141
    %v150 = vmul.f32 %v94, %v141
    %v151 = vmul.f32 %v96, %v141
    %v152 = vmul.f32 %v98, %v141
    %v153 = vmul.f32 %v100, %v141
    %v154 = vmul.f32 %v102, %v141
    %v155 = vmul.f32 %v104, %v141
    %v156 = vmul.f32 %v106, %v141
    %v157 = vmul.f32 %v108, %v141
    %v158 = vmul.f32 %v110, %v141
    %v159 = vmul.f32 %v112, %v141
    %v160 = vmul.f32 %v114, %v141
    %v161 = vmul.f32 %v116, %v141
    %v162 = vmul.f32 %v118, %v141
    %v163 = vmul.f32 %v120, %v141
    %v164 = vmul.f32 %v122, %v141
    %v165 = vmul.f32 %v124, %v141
    %v166 = vmul.f32 %v126, %v141
    %v167 = vmul.f32 %v128, %v141
    %v168 = vmul.f32 %v130, %v141
    %v169 = vmul.f32 %v132, %v141
    %v170 = vmul.f32 %v134, %v141
    %v171 = vmul.f32 %v136, %v141
    %v172 = vmul.f32 %v138, %v141
    %v173 = vmul.f32 %v140, %v141
    %v174 = vld [vmem:[%s1] sm:$0xff]
    %v175 = vld [vmem:[%s1 + $0x8] sm:$0xff]
    %v176 = vld [vmem:[%s1 + $0x10] sm:$0xff]
    %v177 = vld [vmem:[%s1 + $0x18] sm:$0xff]
    %v178 = vld [vmem:[%s2] sm:$0x1]
    %v180 = vlaneseq
    %v181 = vshrl.u32 %v180, 7
    %v182 = vsub.s32 0, %v181
    %v183 = vrot.slane %v178, %v182
    %v217 = vlaneseq
    %v218 = vand.u32 %v217, 127
    %v219 = vlaneseq
    %v220 = vshrl.u32 %v219, 7
    %v221 = vsub.s32 %v218, %v220
    %v222 = vrot.slane %v142, %v221
    %v223 = vadd.s32 %v218, 4294967288
    %v224 = vlaneseq
    %v225 = vshrl.u32 %v224, 7
    %v226 = vsub.s32 %v223, %v225
    %v227 = vrot.slane %v143, %v226
    %vm228 = vcmask 130112
    %v229 = vsel %vm228, %v227, %v222
    %v230 = vadd.s32 %v218, 4294967280
    %v231 = vlaneseq
    %v232 = vshrl.u32 %v231, 7
    %v233 = vsub.s32 %v230, %v232
    %v234 = vrot.slane %v144, %v233
    %vm235 = vcmask 195712
    %v236 = vsel %vm235, %v234, %v229
    %v237 = vadd.s32 %v218, 4294967272
    %v238 = vlaneseq
    %v239 = vshrl.u32 %v238, 7
    %v240 = vsub.s32 %v237, %v239
    %v241 = vrot.slane %v145, %v240
    %vm242 = vcmask 261312
    %v243 = vsel %vm242, %v241, %v236
    %v244 = vlaneseq
    %v245 = vshrl.u32 %v244, 7
    %v246 = vsub.s32 %v218, %v245
    %v247 = vrot.slane %v146, %v246
    %v248 = vlaneseq
    %v249 = vshrl.u32 %v248, 7
    %v250 = vsub.s32 %v223, %v249
    %v251 = vrot.slane %v147, %v250
    %v252 = vsel %vm228, %v251, %v247
    %v253 = vlaneseq
    %v254 = vshrl.u32 %v253, 7
    %v255 = vsub.s32 %v230, %v254
    %v256 = vrot.slane %v148, %v255
    %v257 = vsel %vm235, %v256, %v252
    %v258 = vlaneseq
    %v259 = vshrl.u32 %v258, 7
    %v260 = vsub.s32 %v237, %v259
    %v261 = vrot.slane %v149, %v260
    %v262 = vsel %vm242, %v261, %v257
    %v263 = vlaneseq
    %v264 = vshrl.u32 %v263, 7
    %v265 = vsub.s32 %v218, %v264
    %v266 = vrot.slane %v150, %v265
    %v267 = vlaneseq
    %v268 = vshrl.u32 %v267, 7
    %v269 = vsub.s32 %v223, %v268
    %v270 = vrot.slane %v151, %v269
    %v271 = vsel %vm228, %v270, %v266
    %v272 = vlaneseq
    %v273 = vshrl.u32 %v272, 7
    %v274 = vsub.s32 %v230, %v273
    %v275 = vrot.slane %v152, %v274
    %v276 = vsel %vm235, %v275, %v271
    %v277 = vlaneseq
    %v278 = vshrl.u32 %v277, 7
    %v279 = vsub.s32 %v237, %v278
    %v280 = vrot.slane %v153, %v279
    %v281 = vsel %vm242, %v280, %v276
    %v282 = vlaneseq
    %v283 = vshrl.u32 %v282, 7
    %v284 = vsub.s32 %v218, %v283
    %v285 = vrot.slane %v154, %v284
    %v286 = vlaneseq
    %v287 = vshrl.u32 %v286, 7
    %v288 = vsub.s32 %v223, %v287
    %v289 = vrot.slane %v155, %v288
    %v290 = vsel %vm228, %v289, %v285
    %v291 = vlaneseq
    %v292 = vshrl.u32 %v291, 7
    %v293 = vsub.s32 %v230, %v292
    %v294 = vrot.slane %v156, %v293
    %v295 = vsel %vm235, %v294, %v290
    %v296 = vlaneseq
    %v297 = vshrl.u32 %v296, 7
    %v298 = vsub.s32 %v237, %v297
    %v299 = vrot.slane %v157, %v298
    %v300 = vsel %vm242, %v299, %v295
    %v301 = vlaneseq
    %v302 = vshrl.u32 %v301, 7
    %v303 = vsub.s32 %v218, %v302
    %v304 = vrot.slane %v158, %v303
    %v305 = vlaneseq
    %v306 = vshrl.u32 %v305, 7
    %v307 = vsub.s32 %v223, %v306
    %v308 = vrot.slane %v159, %v307
    %v309 = vsel %vm228, %v308, %v304
    %v310 = vlaneseq
    %v311 = vshrl.u32 %v310, 7
    %v312 = vsub.s32 %v230, %v311
    %v313 = vrot.slane %v160, %v312
    %v314 = vsel %vm235, %v313, %v309
    %v315 = vlaneseq
    %v316 = vshrl.u32 %v315, 7
    %v317 = vsub.s32 %v237, %v316
    %v318 = vrot.slane %v161, %v317
    %v319 = vsel %vm242, %v318, %v314
    %v320 = vlaneseq
    %v321 = vshrl.u32 %v320, 7
    %v322 = vsub.s32 %v218, %v321
    %v323 = vrot.slane %v162, %v322
    %v324 = vlaneseq
    %v325 = vshrl.u32 %v324, 7
    %v326 = vsub.s32 %v223, %v325
    %v327 = vrot.slane %v163, %v326
    %v328 = vsel %vm228, %v327, %v323
    %v329 = vlaneseq
    %v330 = vshrl.u32 %v329, 7
    %v331 = vsub.s32 %v230, %v330
    %v332 = vrot.slane %v164, %v331
    %v333 = vsel %vm235, %v332, %v328
    %v334 = vlaneseq
    %v335 = vshrl.u32 %v334, 7
    %v336 = vsub.s32 %v237, %v335
    %v337 = vrot.slane %v165, %v336
    %v338 = vsel %vm242, %v337, %v333
    %v339 = vlaneseq
    %v340 = vshrl.u32 %v339, 7
    %v341 = vsub.s32 %v218, %v340
    %v342 = vrot.slane %v166, %v341
    %v343 = vlaneseq
    %v344 = vshrl.u32 %v343, 7
    %v345 = vsub.s32 %v223, %v344
    %v346 = vrot.slane %v167, %v345
    %v347 = vsel %vm228, %v346, %v342
    %v348 = vlaneseq
    %v349 = vshrl.u32 %v348, 7
    %v350 = vsub.s32 %v230, %v349
    %v351 = vrot.slane %v168, %v350
    %v352 = vsel %vm235, %v351, %v347
    %v353 = vlaneseq
    %v354 = vshrl.u32 %v353, 7
    %v355 = vsub.s32 %v237, %v354
    %v356 = vrot.slane %v169, %v355
    %v357 = vsel %vm242, %v356, %v352
    %v358 = vlaneseq
    %v359 = vshrl.u32 %v358, 7
    %v360 = vsub.s32 %v218, %v359
    %v361 = vrot.slane %v170, %v360
    %v362 = vlaneseq
    %v363 = vshrl.u32 %v362, 7
    %v364 = vsub.s32 %v223, %v363
    %v365 = vrot.slane %v171, %v364
    %v366 = vsel %vm228, %v365, %v361
    %v367 = vlaneseq
    %v368 = vshrl.u32 %v367, 7
    %v369 = vsub.s32 %v230, %v368
    %v370 = vrot.slane %v172, %v369
    %v371 = vsel %vm235, %v370, %v366
    %v372 = vlaneseq
    %v373 = vshrl.u32 %v372, 7
    %v374 = vsub.s32 %v237, %v373
    %v375 = vrot.slane %v173, %v374
    %v376 = vsel %vm242, %v375, %v371
    %vm377 = vcmask 1041409
    %v378 = vsel %vm377, %v262, %v243
    %vm379 = vcmask 1042434
    %v380 = vsel %vm379, %v281, %v378
    %vm381 = vcmask 1043459
    %v382 = vsel %vm381, %v300, %v380
    %vm383 = vcmask 1044484
    %v384 = vsel %vm383, %v319, %v382
    %vm385 = vcmask 1045509
    %v386 = vsel %vm385, %v338, %v384
    %vm387 = vcmask 1046534
    %v388 = vsel %vm387, %v357, %v386
    %vm389 = vcmask 1047559
    %v390 = vsel %vm389, %v376, %v388
    %vm391 = vcmask 261120
    %v392 = vsel %vm391, %v390, 0
    %394 = vmatprep.subr.mxu0 0.0
    %395 = vmatpush1.msra.mxu0 0.0
    %396 = vmatprep.subr.mxu0 0.0
    %397 = vmatpush1.msra.mxu0 0.0
    %398 = vmatprep.subr.mxu0 0.0
    %399 = vmatpush1.msra.mxu0 0.0
    %400 = vmatprep.subr.mxu0 0.0
    %401 = vmatpush1.msra.mxu0 0.0
    %402 = vmatprep.subr.mxu0 0.0
    %403 = vmatpush1.msra.mxu0 0.0
    %404 = vmatprep.subr.mxu0 0.0
    %405 = vmatpush1.msra.mxu0 0.0
    %406 = vmatprep.subr.mxu0 0.0
    %407 = vmatpush1.msra.mxu0 0.0
    %408 = vmatprep.subr.mxu0 0.0
    %409 = vmatpush1.msra.mxu0 0.0
    %410 = vmatprep.subr.mxu0 0.0
    %411 = vmatpush1.msra.mxu0 0.0
    %412 = vmatprep.subr.mxu0 0.0
    %413 = vmatpush1.msra.mxu0 0.0
    %414 = vmatprep.subr.mxu0 0.0
    %415 = vmatpush1.msra.mxu0 0.0
    %416 = vmatprep.subr.mxu0 0.0
    %417 = vmatpush1.msra.mxu0 0.0
    %418 = vmatprep.subr.mxu0 0.0
    %419 = vmatpush1.msra.mxu0 %v177
    %420 = vmatprep.subr.mxu0 0.0
    %421 = vmatpush1.msra.mxu0 %v176
    %422 = vmatprep.subr.mxu0 0.0
    %423 = vmatpush1.msra.mxu0 %v175
    %424 = vmatprep.subr.mxu0 0.0
    %425 = vmatpush1.msra.mxu0 %v174
    %426 = vmatprep.subr.mxu0 0.0
    %427 = vmatpush2.msra.mxu0 0.0
    %428 = vmatprep.subr.mxu0 0.0
    %429 = vmatpush2.msra.mxu0 0.0
    %430 = vmatprep.subr.mxu0 0.0
    %431 = vmatpush2.msra.mxu0 0.0
    %432 = vmatprep.subr.mxu0 0.0
    %433 = vmatpush2.msra.mxu0 0.0
    %434 = vmatprep.subr.mxu0 0.0
    %435 = vmatpush2.msra.mxu0 0.0
    %436 = vmatprep.subr.mxu0 0.0
    %437 = vmatpush2.msra.mxu0 0.0
    %438 = vmatprep.subr.mxu0 0.0
    %439 = vmatpush2.msra.mxu0 0.0
    %440 = vmatprep.subr.mxu0 0.0
    %441 = vmatpush2.msra.mxu0 0.0
    %442 = vmatprep.subr.mxu0 0.0
    %443 = vmatpush2.msra.mxu0 0.0
    %444 = vmatprep.subr.mxu0 0.0
    %445 = vmatpush2.msra.mxu0 0.0
    %446 = vmatprep.subr.mxu0 0.0
    %447 = vmatpush2.msra.mxu0 0.0
    %448 = vmatprep.subr.mxu0 0.0
    %449 = vmatpush2.msra.mxu0 0.0
    %450 = vmatprep.subr.mxu0 0.0
    %451 = vmatpush2.msra.mxu0 0.0
    %452 = vmatprep.subr.mxu0 0.0
    %453 = vmatpush2.msra.mxu0 0.0
    %454 = vmatprep.subr.mxu0 0.0
    %455 = vmatpush2.msra.mxu0 0.0
    %456 = vmatprep.subr.mxu0 0.0
    %457 = vmatpush2.msra.mxu0 0.0
    %458 = vmatprep.mubr.f32.mxu0 0.0
    %459 = vmatmul.mubr.f32.gmra.mxu0 %v392
    %v460 = vpop.f32.mrf.mxu0
    %v461 = vadd.f32 %v183, %v460
    %v462 = vpop.f32.mrf.mxu0
    %463 = vdwg.mxu0
    %v464 = vmax.f32 %v461, 0.0
    %v465 = vld [vmem:[%s3] sm:$0x3]
    %v466 = vld [vmem:[%s4] sm:$0x1]
    %v468 = vlaneseq
    %v469 = vshrl.u32 %v468, 7
    %v470 = vsub.s32 0, %v469
    %v471 = vrot.slane %v466, %v470
    %vm473 = vcmask 15360
    %v475 = vsel %vm473, %v464, 0
    %vm477 = vcmask 1041408
    %v479 = vsel %vm477, %v465, 0
    %481 = vmatprep.subr.mxu0 0.0
    %482 = vmatpush1.msra.mxu0 0.0
    %483 = vmatprep.subr.mxu0 0.0
    %484 = vmatpush1.msra.mxu0 0.0
    %485 = vmatprep.subr.mxu0 0.0
    %486 = vmatpush1.msra.mxu0 0.0
    %487 = vmatprep.subr.mxu0 0.0
    %488 = vmatpush1.msra.mxu0 0.0
    %489 = vmatprep.subr.mxu0 0.0
    %490 = vmatpush1.msra.mxu0 0.0
    %491 = vmatprep.subr.mxu0 0.0
    %492 = vmatpush1.msra.mxu0 0.0
    %493 = vmatprep.subr.mxu0 0.0
    %494 = vmatpush1.msra.mxu0 0.0
    %495 = vmatprep.subr.mxu0 0.0
    %496 = vmatpush1.msra.mxu0 0.0
    %497 = vmatprep.subr.mxu0 0.0
    %498 = vmatpush1.msra.mxu0 0.0
    %499 = vmatprep.subr.mxu0 0.0
    %500 = vmatpush1.msra.mxu0 0.0
    %501 = vmatprep.subr.mxu0 0.0
    %502 = vmatpush1.msra.mxu0 0.0
    %503 = vmatprep.subr.mxu0 0.0
    %504 = vmatpush1.msra.mxu0 0.0
    %505 = vmatprep.subr.mxu0 0.0
    %506 = vmatpush1.msra.mxu0 0.0
    %507 = vmatprep.subr.mxu0 0.0
    %508 = vmatpush1.msra.mxu0 0.0
    %509 = vmatprep.subr.mxu0 0.0
    %510 = vmatpush1.msra.mxu0 0.0
    %511 = vmatprep.subr.mxu0 0.0
    %512 = vmatpush1.msra.mxu0 %v479
    %513 = vmatprep.subr.mxu0 0.0
    %514 = vmatpush2.msra.mxu0 0.0
    %515 = vmatprep.subr.mxu0 0.0
    %516 = vmatpush2.msra.mxu0 0.0
    %517 = vmatprep.subr.mxu0 0.0
    %518 = vmatpush2.msra.mxu0 0.0
    %519 = vmatprep.subr.mxu0 0.0
    %520 = vmatpush2.msra.mxu0 0.0
    %521 = vmatprep.subr.mxu0 0.0
    %522 = vmatpush2.msra.mxu0 0.0
    %523 = vmatprep.subr.mxu0 0.0
    %524 = vmatpush2.msra.mxu0 0.0
    %525 = vmatprep.subr.mxu0 0.0
    %526 = vmatpush2.msra.mxu0 0.0
    %527 = vmatprep.subr.mxu0 0.0
    %528 = vmatpush2.msra.mxu0 0.0
    %529 = vmatprep.subr.mxu0 0.0
    %530 = vmatpush2.msra.mxu0 0.0
    %531 = vmatprep.subr.mxu0 0.0
    %532 = vmatpush2.msra.mxu0 0.0
    %533 = vmatprep.subr.mxu0 0.0
    %534 = vmatpush2.msra.mxu0 0.0
    %535 = vmatprep.subr.mxu0 0.0
    %536 = vmatpush2.msra.mxu0 0.0
    %537 = vmatprep.subr.mxu0 0.0
    %538 = vmatpush2.msra.mxu0 0.0
    %539 = vmatprep.subr.mxu0 0.0
    %540 = vmatpush2.msra.mxu0 0.0
    %541 = vmatprep.subr.mxu0 0.0
    %542 = vmatpush2.msra.mxu0 0.0
    %543 = vmatprep.subr.mxu0 0.0
    %544 = vmatpush2.msra.mxu0 0.0
    %545 = vmatprep.mubr.f32.mxu0 0.0
    %546 = vmatmul.mubr.f32.gmra.mxu0 %v475
    %v547 = vpop.f32.mrf.mxu0
    %v548 = vadd.f32 %v471, %v547
    %v549 = vpop.f32.mrf.mxu0
    %550 = vdwg.mxu0
    %v551 = vxor.u32 %v548, 2147483648
    %v552 = vmul.f32 %v551, 1.442695
    %v553 = vpow.pop %v552
    %v554 = vadd.f32 %v553, 1.0
    %v555 = vrcp.pop %v554
    %v556 = vmul.f32 1.0, %v555
    %v557 = vld [vmem:[%s5] sm:$0x7]
    %v559 = vsel %vm391, %v557, 0
    %561 = vmatprep.subr.mxu0 0.0
    %562 = vmatpush1.msra.mxu0 0.0
    %563 = vmatprep.subr.mxu0 0.0
    %564 = vmatpush1.msra.mxu0 0.0
    %565 = vmatprep.subr.mxu0 0.0
    %566 = vmatpush1.msra.mxu0 0.0
    %567 = vmatprep.subr.mxu0 0.0
    %568 = vmatpush1.msra.mxu0 0.0
    %569 = vmatprep.subr.mxu0 0.0
    %570 = vmatpush1.msra.mxu0 0.0
    %571 = vmatprep.subr.mxu0 0.0
    %572 = vmatpush1.msra.mxu0 0.0
    %573 = vmatprep.subr.mxu0 0.0
    %574 = vmatpush1.msra.mxu0 0.0
    %575 = vmatprep.subr.mxu0 0.0
    %576 = vmatpush1.msra.mxu0 0.0
    %577 = vmatprep.subr.mxu0 0.0
    %578 = vmatpush1.msra.mxu0 0.0
    %579 = vmatprep.subr.mxu0 0.0
    %580 = vmatpush1.msra.mxu0 0.0
    %581 = vmatprep.subr.mxu0 0.0
    %582 = vmatpush1.msra.mxu0 0.0
    %583 = vmatprep.subr.mxu0 0.0
    %584 = vmatpush1.msra.mxu0 0.0
    %585 = vmatprep.subr.mxu0 0.0
    %586 = vmatpush1.msra.mxu0 %v48
    %587 = vmatprep.subr.mxu0 0.0
    %588 = vmatpush1.msra.mxu0 %v47
    %589 = vmatprep.subr.mxu0 0.0
    %590 = vmatpush1.msra.mxu0 %v46
    %591 = vmatprep.subr.mxu0 0.0
    %592 = vmatpush1.msra.mxu0 %v45
    %593 = vmatprep.subr.mxu0 0.0
    %594 = vmatpush2.msra.mxu0 0.0
    %595 = vmatprep.subr.mxu0 0.0
    %596 = vmatpush2.msra.mxu0 0.0
    %597 = vmatprep.subr.mxu0 0.0
    %598 = vmatpush2.msra.mxu0 0.0
    %599 = vmatprep.subr.mxu0 0.0
    %600 = vmatpush2.msra.mxu0 0.0
    %601 = vmatprep.subr.mxu0 0.0
    %602 = vmatpush2.msra.mxu0 0.0
    %603 = vmatprep.subr.mxu0 0.0
    %604 = vmatpush2.msra.mxu0 0.0
    %605 = vmatprep.subr.mxu0 0.0
    %606 = vmatpush2.msra.mxu0 0.0
    %607 = vmatprep.subr.mxu0 0.0
    %608 = vmatpush2.msra.mxu0 0.0
    %609 = vmatprep.subr.mxu0 0.0
    %610 = vmatpush2.msra.mxu0 0.0
    %611 = vmatprep.subr.mxu0 0.0
    %612 = vmatpush2.msra.mxu0 0.0
    %613 = vmatprep.subr.mxu0 0.0
    %614 = vmatpush2.msra.mxu0 0.0
    %615 = vmatprep.subr.mxu0 0.0
    %616 = vmatpush2.msra.mxu0 0.0
    %617 = vmatprep.subr.mxu0 0.0
    %618 = vmatpush2.msra.mxu0 0.0
    %619 = vmatprep.subr.mxu0 0.0
    %620 = vmatpush2.msra.mxu0 0.0
    %621 = vmatprep.subr.mxu0 0.0
    %622 = vmatpush2.msra.mxu0 0.0
    %623 = vmatprep.subr.mxu0 0.0
    %624 = vmatpush2.msra.mxu0 0.0
    %625 = vmatprep.mubr.f32.mxu0 0.0
    %626 = vmatmul.mubr.f32.gmra.mxu0 %v559
    %v627 = vpop.f32.mrf.mxu0
    %v628 = vadd.f32 0.0, %v627
    %v629 = vpop.f32.mrf.mxu0
    %630 = vdwg.mxu0
    %631 = vmatprep.subr.mxu0 0.0
    %632 = vmatpush1.msra.mxu0 0.0
    %633 = vmatprep.subr.mxu0 0.0
    %634 = vmatpush1.msra.mxu0 0.0
    %635 = vmatprep.subr.mxu0 0.0
    %636 = vmatpush1.msra.mxu0 0.0
    %637 = vmatprep.subr.mxu0 0.0
    %638 = vmatpush1.msra.mxu0 0.0
    %639 = vmatprep.subr.mxu0 0.0
    %640 = vmatpush1.msra.mxu0 0.0
    %641 = vmatprep.subr.mxu0 0.0
    %642 = vmatpush1.msra.mxu0 0.0
    %643 = vmatprep.subr.mxu0 0.0
    %644 = vmatpush1.msra.mxu0 0.0
    %645 = vmatprep.subr.mxu0 0.0
    %646 = vmatpush1.msra.mxu0 0.0
    %647 = vmatprep.subr.mxu0 0.0
    %648 = vmatpush1.msra.mxu0 0.0
    %649 = vmatprep.subr.mxu0 0.0
    %650 = vmatpush1.msra.mxu0 0.0
    %651 = vmatprep.subr.mxu0 0.0
    %652 = vmatpush1.msra.mxu0 0.0
    %653 = vmatprep.subr.mxu0 0.0
    %654 = vmatpush1.msra.mxu0 0.0
    %655 = vmatprep.subr.mxu0 0.0
    %656 = vmatpush1.msra.mxu0 %v52
    %657 = vmatprep.subr.mxu0 0.0
    %658 = vmatpush1.msra.mxu0 %v51
    %659 = vmatprep.subr.mxu0 0.0
    %660 = vmatpush1.msra.mxu0 %v50
    %661 = vmatprep.subr.mxu0 0.0
    %662 = vmatpush1.msra.mxu0 %v49
    %663 = vmatprep.subr.mxu0 0.0
    %664 = vmatpush2.msra.mxu0 0.0
    %665 = vmatprep.subr.mxu0 0.0
    %666 = vmatpush2.msra.mxu0 0.0
    %667 = vmatprep.subr.mxu0 0.0
    %668 = vmatpush2.msra.mxu0 0.0
    %669 = vmatprep.subr.mxu0 0.0
    %670 = vmatpush2.msra.mxu0 0.0
    %671 = vmatprep.subr.mxu0 0.0
    %672 = vmatpush2.msra.mxu0 0.0
    %673 = vmatprep.subr.mxu0 0.0
    %674 = vmatpush2.msra.mxu0 0.0
    %675 = vmatprep.subr.mxu0 0.0
    %676 = vmatpush2.msra.mxu0 0.0
    %677 = vmatprep.subr.mxu0 0.0
    %678 = vmatpush2.msra.mxu0 0.0
    %679 = vmatprep.subr.mxu0 0.0
    %680 = vmatpush2.msra.mxu0 0.0
    %681 = vmatprep.subr.mxu0 0.0
    %682 = vmatpush2.msra.mxu0 0.0
    %683 = vmatprep.subr.mxu0 0.0
    %684 = vmatpush2.msra.mxu0 0.0
    %685 = vmatprep.subr.mxu0 0.0
    %686 = vmatpush2.msra.mxu0 0.0
    %687 = vmatprep.subr.mxu0 0.0
    %688 = vmatpush2.msra.mxu0 0.0
    %689 = vmatprep.subr.mxu0 0.0
    %690 = vmatpush2.msra.mxu0 0.0
    %691 = vmatprep.subr.mxu0 0.0
    %692 = vmatpush2.msra.mxu0 0.0
    %693 = vmatprep.subr.mxu0 0.0
    %694 = vmatpush2.msra.mxu0 0.0
    %695 = vmatprep.mubr.f32.mxu0 0.0
    %696 = vmatmul.mubr.f32.gmra.mxu0 %v559
    %v697 = vpop.f32.mrf.mxu0
    %v698 = vadd.f32 0.0, %v697
    %v699 = vpop.f32.mrf.mxu0
    %700 = vdwg.mxu0
    %701 = vmatprep.subr.mxu0 0.0
    %702 = vmatpush1.msra.mxu0 0.0
    %703 = vmatprep.subr.mxu0 0.0
    %704 = vmatpush1.msra.mxu0 0.0
    %705 = vmatprep.subr.mxu0 0.0
    %706 = vmatpush1.msra.mxu0 0.0
    %707 = vmatprep.subr.mxu0 0.0
    %708 = vmatpush1.msra.mxu0 0.0
    %709 = vmatprep.subr.mxu0 0.0
    %710 = vmatpush1.msra.mxu0 0.0
    %711 = vmatprep.subr.mxu0 0.0
    %712 = vmatpush1.msra.mxu0 0.0
    %713 = vmatprep.subr.mxu0 0.0
    %714 = vmatpush1.msra.mxu0 0.0
    %715 = vmatprep.subr.mxu0 0.0
    %716 = vmatpush1.msra.mxu0 0.0
    %717 = vmatprep.subr.mxu0 0.0
    %718 = vmatpush1.msra.mxu0 0.0
    %719 = vmatprep.subr.mxu0 0.0
    %720 = vmatpush1.msra.mxu0 0.0
    %721 = vmatprep.subr.mxu0 0.0
    %722 = vmatpush1.msra.mxu0 0.0
    %723 = vmatprep.subr.mxu0 0.0
    %724 = vmatpush1.msra.mxu0 0.0
    %725 = vmatprep.subr.mxu0 0.0
    %726 = vmatpush1.msra.mxu0 %v56
    %727 = vmatprep.subr.mxu0 0.0
    %728 = vmatpush1.msra.mxu0 %v55
    %729 = vmatprep.subr.mxu0 0.0
    %730 = vmatpush1.msra.mxu0 %v54
    %731 = vmatprep.subr.mxu0 0.0
    %732 = vmatpush1.msra.mxu0 %v53
    %733 = vmatprep.subr.mxu0 0.0
    %734 = vmatpush2.msra.mxu0 0.0
    %735 = vmatprep.subr.mxu0 0.0
    %736 = vmatpush2.msra.mxu0 0.0
    %737 = vmatprep.subr.mxu0 0.0
    %738 = vmatpush2.msra.mxu0 0.0
    %739 = vmatprep.subr.mxu0 0.0
    %740 = vmatpush2.msra.mxu0 0.0
    %741 = vmatprep.subr.mxu0 0.0
    %742 = vmatpush2.msra.mxu0 0.0
    %743 = vmatprep.subr.mxu0 0.0
    %744 = vmatpush2.msra.mxu0 0.0
    %745 = vmatprep.subr.mxu0 0.0
    %746 = vmatpush2.msra.mxu0 0.0
    %747 = vmatprep.subr.mxu0 0.0
    %748 = vmatpush2.msra.mxu0 0.0
    %749 = vmatprep.subr.mxu0 0.0
    %750 = vmatpush2.msra.mxu0 0.0
    %751 = vmatprep.subr.mxu0 0.0
    %752 = vmatpush2.msra.mxu0 0.0
    %753 = vmatprep.subr.mxu0 0.0
    %754 = vmatpush2.msra.mxu0 0.0
    %755 = vmatprep.subr.mxu0 0.0
    %756 = vmatpush2.msra.mxu0 0.0
    %757 = vmatprep.subr.mxu0 0.0
    %758 = vmatpush2.msra.mxu0 0.0
    %759 = vmatprep.subr.mxu0 0.0
    %760 = vmatpush2.msra.mxu0 0.0
    %761 = vmatprep.subr.mxu0 0.0
    %762 = vmatpush2.msra.mxu0 0.0
    %763 = vmatprep.subr.mxu0 0.0
    %764 = vmatpush2.msra.mxu0 0.0
    %765 = vmatprep.mubr.f32.mxu0 0.0
    %766 = vmatmul.mubr.f32.gmra.mxu0 %v559
    %v767 = vpop.f32.mrf.mxu0
    %v768 = vadd.f32 0.0, %v767
    %v769 = vpop.f32.mrf.mxu0
    %770 = vdwg.mxu0
    %771 = vmatprep.subr.mxu0 0.0
    %772 = vmatpush1.msra.mxu0 0.0
    %773 = vmatprep.subr.mxu0 0.0
    %774 = vmatpush1.msra.mxu0 0.0
    %775 = vmatprep.subr.mxu0 0.0
    %776 = vmatpush1.msra.mxu0 0.0
    %777 = vmatprep.subr.mxu0 0.0
    %778 = vmatpush1.msra.mxu0 0.0
    %779 = vmatprep.subr.mxu0 0.0
    %780 = vmatpush1.msra.mxu0 0.0
    %781 = vmatprep.subr.mxu0 0.0
    %782 = vmatpush1.msra.mxu0 0.0
    %783 = vmatprep.subr.mxu0 0.0
    %784 = vmatpush1.msra.mxu0 0.0
    %785 = vmatprep.subr.mxu0 0.0
    %786 = vmatpush1.msra.mxu0 0.0
    %787 = vmatprep.subr.mxu0 0.0
    %788 = vmatpush1.msra.mxu0 0.0
    %789 = vmatprep.subr.mxu0 0.0
    %790 = vmatpush1.msra.mxu0 0.0
    %791 = vmatprep.subr.mxu0 0.0
    %792 = vmatpush1.msra.mxu0 0.0
    %793 = vmatprep.subr.mxu0 0.0
    %794 = vmatpush1.msra.mxu0 0.0
    %795 = vmatprep.subr.mxu0 0.0
    %796 = vmatpush1.msra.mxu0 %v60
    %797 = vmatprep.subr.mxu0 0.0
    %798 = vmatpush1.msra.mxu0 %v59
    %799 = vmatprep.subr.mxu0 0.0
    %800 = vmatpush1.msra.mxu0 %v58
    %801 = vmatprep.subr.mxu0 0.0
    %802 = vmatpush1.msra.mxu0 %v57
    %803 = vmatprep.subr.mxu0 0.0
    %804 = vmatpush2.msra.mxu0 0.0
    %805 = vmatprep.subr.mxu0 0.0
    %806 = vmatpush2.msra.mxu0 0.0
    %807 = vmatprep.subr.mxu0 0.0
    %808 = vmatpush2.msra.mxu0 0.0
    %809 = vmatprep.subr.mxu0 0.0
    %810 = vmatpush2.msra.mxu0 0.0
    %811 = vmatprep.subr.mxu0 0.0
    %812 = vmatpush2.msra.mxu0 0.0
    %813 = vmatprep.subr.mxu0 0.0
    %814 = vmatpush2.msra.mxu0 0.0
    %815 = vmatprep.subr.mxu0 0.0
    %816 = vmatpush2.msra.mxu0 0.0
    %817 = vmatprep.subr.mxu0 0.0
    %818 = vmatpush2.msra.mxu0 0.0
    %819 = vmatprep.subr.mxu0 0.0
    %820 = vmatpush2.msra.mxu0 0.0
    %821 = vmatprep.subr.mxu0 0.0
    %822 = vmatpush2.msra.mxu0 0.0
    %823 = vmatprep.subr.mxu0 0.0
    %824 = vmatpush2.msra.mxu0 0.0
    %825 = vmatprep.subr.mxu0 0.0
    %826 = vmatpush2.msra.mxu0 0.0
    %827 = vmatprep.subr.mxu0 0.0
    %828 = vmatpush2.msra.mxu0 0.0
    %829 = vmatprep.subr.mxu0 0.0
    %830 = vmatpush2.msra.mxu0 0.0
    %831 = vmatprep.subr.mxu0 0.0
    %832 = vmatpush2.msra.mxu0 0.0
    %833 = vmatprep.subr.mxu0 0.0
    %834 = vmatpush2.msra.mxu0 0.0
    %835 = vmatprep.mubr.f32.mxu0 0.0
    %836 = vmatmul.mubr.f32.gmra.mxu0 %v559
    %v837 = vpop.f32.mrf.mxu0
    %v838 = vadd.f32 0.0, %v837
    %v839 = vpop.f32.mrf.mxu0
    %840 = vdwg.mxu0
    %841 = vmatprep.subr.mxu0 0.0
    %842 = vmatpush1.msra.mxu0 0.0
    %843 = vmatprep.subr.mxu0 0.0
    %844 = vmatpush1.msra.mxu0 0.0
    %845 = vmatprep.subr.mxu0 0.0
    %846 = vmatpush1.msra.mxu0 0.0
    %847 = vmatprep.subr.mxu0 0.0
    %848 = vmatpush1.msra.mxu0 0.0
    %849 = vmatprep.subr.mxu0 0.0
    %850 = vmatpush1.msra.mxu0 0.0
    %851 = vmatprep.subr.mxu0 0.0
    %852 = vmatpush1.msra.mxu0 0.0
    %853 = vmatprep.subr.mxu0 0.0
    %854 = vmatpush1.msra.mxu0 0.0
    %855 = vmatprep.subr.mxu0 0.0
    %856 = vmatpush1.msra.mxu0 0.0
    %857 = vmatprep.subr.mxu0 0.0
    %858 = vmatpush1.msra.mxu0 0.0
    %859 = vmatprep.subr.mxu0 0.0
    %860 = vmatpush1.msra.mxu0 0.0
    %861 = vmatprep.subr.mxu0 0.0
    %862 = vmatpush1.msra.mxu0 0.0
    %863 = vmatprep.subr.mxu0 0.0
    %864 = vmatpush1.msra.mxu0 0.0
    %865 = vmatprep.subr.mxu0 0.0
    %866 = vmatpush1.msra.mxu0 %v64
    %867 = vmatprep.subr.mxu0 0.0
    %868 = vmatpush1.msra.mxu0 %v63
    %869 = vmatprep.subr.mxu0 0.0
    %870 = vmatpush1.msra.mxu0 %v62
    %871 = vmatprep.subr.mxu0 0.0
    %872 = vmatpush1.msra.mxu0 %v61
    %873 = vmatprep.subr.mxu0 0.0
    %874 = vmatpush2.msra.mxu0 0.0
    %875 = vmatprep.subr.mxu0 0.0
    %876 = vmatpush2.msra.mxu0 0.0
    %877 = vmatprep.subr.mxu0 0.0
    %878 = vmatpush2.msra.mxu0 0.0
    %879 = vmatprep.subr.mxu0 0.0
    %880 = vmatpush2.msra.mxu0 0.0
    %881 = vmatprep.subr.mxu0 0.0
    %882 = vmatpush2.msra.mxu0 0.0
    %883 = vmatprep.subr.mxu0 0.0
    %884 = vmatpush2.msra.mxu0 0.0
    %885 = vmatprep.subr.mxu0 0.0
    %886 = vmatpush2.msra.mxu0 0.0
    %887 = vmatprep.subr.mxu0 0.0
    %888 = vmatpush2.msra.mxu0 0.0
    %889 = vmatprep.subr.mxu0 0.0
    %890 = vmatpush2.msra.mxu0 0.0
    %891 = vmatprep.subr.mxu0 0.0
    %892 = vmatpush2.msra.mxu0 0.0
    %893 = vmatprep.subr.mxu0 0.0
    %894 = vmatpush2.msra.mxu0 0.0
    %895 = vmatprep.subr.mxu0 0.0
    %896 = vmatpush2.msra.mxu0 0.0
    %897 = vmatprep.subr.mxu0 0.0
    %898 = vmatpush2.msra.mxu0 0.0
    %899 = vmatprep.subr.mxu0 0.0
    %900 = vmatpush2.msra.mxu0 0.0
    %901 = vmatprep.subr.mxu0 0.0
    %902 = vmatpush2.msra.mxu0 0.0
    %903 = vmatprep.subr.mxu0 0.0
    %904 = vmatpush2.msra.mxu0 0.0
    %905 = vmatprep.mubr.f32.mxu0 0.0
    %906 = vmatmul.mubr.f32.gmra.mxu0 %v559
    %v907 = vpop.f32.mrf.mxu0
    %v908 = vadd.f32 0.0, %v907
    %v909 = vpop.f32.mrf.mxu0
    %910 = vdwg.mxu0
    %911 = vmatprep.subr.mxu0 0.0
    %912 = vmatpush1.msra.mxu0 0.0
    %913 = vmatprep.subr.mxu0 0.0
    %914 = vmatpush1.msra.mxu0 0.0
    %915 = vmatprep.subr.mxu0 0.0
    %916 = vmatpush1.msra.mxu0 0.0
    %917 = vmatprep.subr.mxu0 0.0
    %918 = vmatpush1.msra.mxu0 0.0
    %919 = vmatprep.subr.mxu0 0.0
    %920 = vmatpush1.msra.mxu0 0.0
    %921 = vmatprep.subr.mxu0 0.0
    %922 = vmatpush1.msra.mxu0 0.0
    %923 = vmatprep.subr.mxu0 0.0
    %924 = vmatpush1.msra.mxu0 0.0
    %925 = vmatprep.subr.mxu0 0.0
    %926 = vmatpush1.msra.mxu0 0.0
    %927 = vmatprep.subr.mxu0 0.0
    %928 = vmatpush1.msra.mxu0 0.0
    %929 = vmatprep.subr.mxu0 0.0
    %930 = vmatpush1.msra.mxu0 0.0
    %931 = vmatprep.subr.mxu0 0.0
    %932 = vmatpush1.msra.mxu0 0.0
    %933 = vmatprep.subr.mxu0 0.0
    %934 = vmatpush1.msra.mxu0 0.0
    %935 = vmatprep.subr.mxu0 0.0
    %936 = vmatpush1.msra.mxu0 %v68
    %937 = vmatprep.subr.mxu0 0.0
    %938 = vmatpush1.msra.mxu0 %v67
    %939 = vmatprep.subr.mxu0 0.0
    %940 = vmatpush1.msra.mxu0 %v66
    %941 = vmatprep.subr.mxu0 0.0
    %942 = vmatpush1.msra.mxu0 %v65
    %943 = vmatprep.subr.mxu0 0.0
    %944 = vmatpush2.msra.mxu0 0.0
    %945 = vmatprep.subr.mxu0 0.0
    %946 = vmatpush2.msra.mxu0 0.0
    %947 = vmatprep.subr.mxu0 0.0
    %948 = vmatpush2.msra.mxu0 0.0
    %949 = vmatprep.subr.mxu0 0.0
    %950 = vmatpush2.msra.mxu0 0.0
    %951 = vmatprep.subr.mxu0 0.0
    %952 = vmatpush2.msra.mxu0 0.0
    %953 = vmatprep.subr.mxu0 0.0
    %954 = vmatpush2.msra.mxu0 0.0
    %955 = vmatprep.subr.mxu0 0.0
    %956 = vmatpush2.msra.mxu0 0.0
    %957 = vmatprep.subr.mxu0 0.0
    %958 = vmatpush2.msra.mxu0 0.0
    %959 = vmatprep.subr.mxu0 0.0
    %960 = vmatpush2.msra.mxu0 0.0
    %961 = vmatprep.subr.mxu0 0.0
    %962 = vmatpush2.msra.mxu0 0.0
    %963 = vmatprep.subr.mxu0 0.0
    %964 = vmatpush2.msra.mxu0 0.0
    %965 = vmatprep.subr.mxu0 0.0
    %966 = vmatpush2.msra.mxu0 0.0
    %967 = vmatprep.subr.mxu0 0.0
    %968 = vmatpush2.msra.mxu0 0.0
    %969 = vmatprep.subr.mxu0 0.0
    %970 = vmatpush2.msra.mxu0 0.0
    %971 = vmatprep.subr.mxu0 0.0
    %972 = vmatpush2.msra.mxu0 0.0
    %973 = vmatprep.subr.mxu0 0.0
    %974 = vmatpush2.msra.mxu0 0.0
    %975 = vmatprep.mubr.f32.mxu0 0.0
    %976 = vmatmul.mubr.f32.gmra.mxu0 %v559
    %v977 = vpop.f32.mrf.mxu0
    %v978 = vadd.f32 0.0, %v977
    %v979 = vpop.f32.mrf.mxu0
    %980 = vdwg.mxu0
    %981 = vmatprep.subr.mxu0 0.0
    %982 = vmatpush1.msra.mxu0 0.0
    %983 = vmatprep.subr.mxu0 0.0
    %984 = vmatpush1.msra.mxu0 0.0
    %985 = vmatprep.subr.mxu0 0.0
    %986 = vmatpush1.msra.mxu0 0.0
    %987 = vmatprep.subr.mxu0 0.0
    %988 = vmatpush1.msra.mxu0 0.0
    %989 = vmatprep.subr.mxu0 0.0
    %990 = vmatpush1.msra.mxu0 0.0
    %991 = vmatprep.subr.mxu0 0.0
    %992 = vmatpush1.msra.mxu0 0.0
    %993 = vmatprep.subr.mxu0 0.0
    %994 = vmatpush1.msra.mxu0 0.0
    %995 = vmatprep.subr.mxu0 0.0
    %996 = vmatpush1.msra.mxu0 0.0
    %997 = vmatprep.subr.mxu0 0.0
    %998 = vmatpush1.msra.mxu0 0.0
    %999 = vmatprep.subr.mxu0 0.0
    %1000 = vmatpush1.msra.mxu0 0.0
    %1001 = vmatprep.subr.mxu0 0.0
    %1002 = vmatpush1.msra.mxu0 0.0
    %1003 = vmatprep.subr.mxu0 0.0
    %1004 = vmatpush1.msra.mxu0 0.0
    %1005 = vmatprep.subr.mxu0 0.0
    %1006 = vmatpush1.msra.mxu0 %v72
    %1007 = vmatprep.subr.mxu0 0.0
    %1008 = vmatpush1.msra.mxu0 %v71
    %1009 = vmatprep.subr.mxu0 0.0
    %1010 = vmatpush1.msra.mxu0 %v70
    %1011 = vmatprep.subr.mxu0 0.0
    %1012 = vmatpush1.msra.mxu0 %v69
    %1013 = vmatprep.subr.mxu0 0.0
    %1014 = vmatpush2.msra.mxu0 0.0
    %1015 = vmatprep.subr.mxu0 0.0
    %1016 = vmatpush2.msra.mxu0 0.0
    %1017 = vmatprep.subr.mxu0 0.0
    %1018 = vmatpush2.msra.mxu0 0.0
    %1019 = vmatprep.subr.mxu0 0.0
    %1020 = vmatpush2.msra.mxu0 0.0
    %1021 = vmatprep.subr.mxu0 0.0
    %1022 = vmatpush2.msra.mxu0 0.0
    %1023 = vmatprep.subr.mxu0 0.0
    %1024 = vmatpush2.msra.mxu0 0.0
    %1025 = vmatprep.subr.mxu0 0.0
    %1026 = vmatpush2.msra.mxu0 0.0
    %1027 = vmatprep.subr.mxu0 0.0
    %1028 = vmatpush2.msra.mxu0 0.0
    %1029 = vmatprep.subr.mxu0 0.0
    %1030 = vmatpush2.msra.mxu0 0.0
    %1031 = vmatprep.subr.mxu0 0.0
    %1032 = vmatpush2.msra.mxu0 0.0
    %1033 = vmatprep.subr.mxu0 0.0
    %1034 = vmatpush2.msra.mxu0 0.0
    %1035 = vmatprep.subr.mxu0 0.0
    %1036 = vmatpush2.msra.mxu0 0.0
    %1037 = vmatprep.subr.mxu0 0.0
    %1038 = vmatpush2.msra.mxu0 0.0
    %1039 = vmatprep.subr.mxu0 0.0
    %1040 = vmatpush2.msra.mxu0 0.0
    %1041 = vmatprep.subr.mxu0 0.0
    %1042 = vmatpush2.msra.mxu0 0.0
    %1043 = vmatprep.subr.mxu0 0.0
    %1044 = vmatpush2.msra.mxu0 0.0
    %1045 = vmatprep.mubr.f32.mxu0 0.0
    %1046 = vmatmul.mubr.f32.gmra.mxu0 %v559
    %v1047 = vpop.f32.mrf.mxu0
    %v1048 = vadd.f32 0.0, %v1047
    %v1049 = vpop.f32.mrf.mxu0
    %1050 = vdwg.mxu0
    %1051 = vmatprep.subr.mxu0 0.0
    %1052 = vmatpush1.msra.mxu0 0.0
    %1053 = vmatprep.subr.mxu0 0.0
    %1054 = vmatpush1.msra.mxu0 0.0
    %1055 = vmatprep.subr.mxu0 0.0
    %1056 = vmatpush1.msra.mxu0 0.0
    %1057 = vmatprep.subr.mxu0 0.0
    %1058 = vmatpush1.msra.mxu0 0.0
    %1059 = vmatprep.subr.mxu0 0.0
    %1060 = vmatpush1.msra.mxu0 0.0
    %1061 = vmatprep.subr.mxu0 0.0
    %1062 = vmatpush1.msra.mxu0 0.0
    %1063 = vmatprep.subr.mxu0 0.0
    %1064 = vmatpush1.msra.mxu0 0.0
    %1065 = vmatprep.subr.mxu0 0.0
    %1066 = vmatpush1.msra.mxu0 0.0
    %1067 = vmatprep.subr.mxu0 0.0
    %1068 = vmatpush1.msra.mxu0 0.0
    %1069 = vmatprep.subr.mxu0 0.0
    %1070 = vmatpush1.msra.mxu0 0.0
    %1071 = vmatprep.subr.mxu0 0.0
    %1072 = vmatpush1.msra.mxu0 0.0
    %1073 = vmatprep.subr.mxu0 0.0
    %1074 = vmatpush1.msra.mxu0 0.0
    %1075 = vmatprep.subr.mxu0 0.0
    %1076 = vmatpush1.msra.mxu0 %v76
    %1077 = vmatprep.subr.mxu0 0.0
    %1078 = vmatpush1.msra.mxu0 %v75
    %1079 = vmatprep.subr.mxu0 0.0
    %1080 = vmatpush1.msra.mxu0 %v74
    %1081 = vmatprep.subr.mxu0 0.0
    %1082 = vmatpush1.msra.mxu0 %v73
    %1083 = vmatprep.subr.mxu0 0.0
    %1084 = vmatpush2.msra.mxu0 0.0
    %1085 = vmatprep.subr.mxu0 0.0
    %1086 = vmatpush2.msra.mxu0 0.0
    %1087 = vmatprep.subr.mxu0 0.0
    %1088 = vmatpush2.msra.mxu0 0.0
    %1089 = vmatprep.subr.mxu0 0.0
    %1090 = vmatpush2.msra.mxu0 0.0
    %1091 = vmatprep.subr.mxu0 0.0
    %1092 = vmatpush2.msra.mxu0 0.0
    %1093 = vmatprep.subr.mxu0 0.0
    %1094 = vmatpush2.msra.mxu0 0.0
    %1095 = vmatprep.subr.mxu0 0.0
    %1096 = vmatpush2.msra.mxu0 0.0
    %1097 = vmatprep.subr.mxu0 0.0
    %1098 = vmatpush2.msra.mxu0 0.0
    %1099 = vmatprep.subr.mxu0 0.0
    %1100 = vmatpush2.msra.mxu0 0.0
    %1101 = vmatprep.subr.mxu0 0.0
    %1102 = vmatpush2.msra.mxu0 0.0
    %1103 = vmatprep.subr.mxu0 0.0
    %1104 = vmatpush2.msra.mxu0 0.0
    %1105 = vmatprep.subr.mxu0 0.0
    %1106 = vmatpush2.msra.mxu0 0.0
    %1107 = vmatprep.subr.mxu0 0.0
    %1108 = vmatpush2.msra.mxu0 0.0
    %1109 = vmatprep.subr.mxu0 0.0
    %1110 = vmatpush2.msra.mxu0 0.0
    %1111 = vmatprep.subr.mxu0 0.0
    %1112 = vmatpush2.msra.mxu0 0.0
    %1113 = vmatprep.subr.mxu0 0.0
    %1114 = vmatpush2.msra.mxu0 0.0
    %1115 = vmatprep.mubr.f32.mxu0 0.0
    %1116 = vmatmul.mubr.f32.gmra.mxu0 %v559
    %v1117 = vpop.f32.mrf.mxu0
    %v1118 = vadd.f32 0.0, %v1117
    %v1119 = vpop.f32.mrf.mxu0
    %1120 = vdwg.mxu0
    %v1121 = vld [vmem:[%s6] sm:$0x3]
    %v1130 = vrot.slane %v698, 7
    %v1131 = vsel %vm377, %v1130, %v628
    %v1132 = vrot.slane %v768, 6
    %v1133 = vsel %vm379, %v1132, %v1131
    %v1134 = vrot.slane %v838, 5
    %v1135 = vsel %vm381, %v1134, %v1133
    %v1136 = vrot.slane %v908, 4
    %v1137 = vsel %vm383, %v1136, %v1135
    %v1138 = vrot.slane %v978, 3
    %v1139 = vsel %vm385, %v1138, %v1137
    %v1140 = vrot.slane %v1048, 2
    %v1141 = vsel %vm387, %v1140, %v1139
    %v1142 = vrot.slane %v1118, 1
    %v1143 = vsel %vm389, %v1142, %v1141
    %1145 = vrot.lane.b32.xlu0 %v1143, 1
    %v1146 = vpop.permute.xlu0 %1145
    %v1147 = vlaneseq
    %v1148 = vshrl.u32 %v1147, 7
    %v1149 = vsub.s32 0, %v1148
    %v1150 = vrot.slane %v1121, %v1149
    %v1151 = vmul.f32 %v1146, %v1150
    %v1152 = vrot.slane %v628, 2
    %v1153 = vrot.slane %v698, 1
    %v1154 = vsel %vm377, %v1153, %v1152
    %v1155 = vsel %vm379, %v768, %v1154
    %v1156 = vrot.slane %v838, 7
    %v1157 = vsel %vm381, %v1156, %v1155
    %v1158 = vrot.slane %v908, 6
    %v1159 = vsel %vm383, %v1158, %v1157
    %v1160 = vrot.slane %v978, 5
    %v1161 = vsel %vm385, %v1160, %v1159
    %v1162 = vrot.slane %v1048, 4
    %v1163 = vsel %vm387, %v1162, %v1161
    %v1164 = vrot.slane %v1118, 3
    %v1165 = vsel %vm389, %v1164, %v1163
    %1167 = vrot.lane.b32.xlu0 %v1165, 127
    %v1168 = vpop.permute.xlu0 %1167
    %v1169 = vlaneseq
    %v1170 = vshrl.u32 %v1169, 7
    %v1171 = vsub.s32 1, %v1170
    %v1172 = vrot.slane %v1121, %v1171
    %v1173 = vmul.f32 %v1168, %v1172
    %v1174 = vrot.slane %v628, 1
    %v1175 = vsel %vm377, %v698, %v1174
    %v1176 = vrot.slane %v768, 7
    %v1177 = vsel %vm379, %v1176, %v1175
    %v1178 = vrot.slane %v838, 6
    %v1179 = vsel %vm381, %v1178, %v1177
    %v1180 = vrot.slane %v908, 5
    %v1181 = vsel %vm383, %v1180, %v1179
    %v1182 = vrot.slane %v978, 4
    %v1183 = vsel %vm385, %v1182, %v1181
    %v1184 = vrot.slane %v1048, 3
    %v1185 = vsel %vm387, %v1184, %v1183
    %v1186 = vrot.slane %v1118, 2
    %v1187 = vsel %vm389, %v1186, %v1185
    %v1189 = vadd.f32 %v1151, %v1187
    %v1190 = vadd.f32 %v1189, %v1173
    %s1191 = sld [smem:[#allocation2]]
    %v1192 = vstv %s1191
    %v1193 = vadd.f32 %v1190, %v1192
    %v1194 = vxor.u32 %v1193, 2147483648
    %v1195 = vmul.f32 %v1194, 1.442695
    %v1196 = vpow.pop %v1195
    %v1197 = vadd.f32 %v1196, 1.0
    %v1198 = vrcp.pop %v1197
    %v1199 = vmul.f32 1.0, %v1198
    %v1200 = vlaneseq
    %v1201 = vshrl.u32 %v1200, 7
    %v1202 = vsub.s32 0, %v1201
    %v1203 = vrot.slane %v556, %v1202
    %1205 = vbcast.lane.b32.xlu0 %v1203, 256
    %v1206 = vpop.permute.xlu0 %1205
    %s1208 = sor.u32 256, 8
    %1209 = vbcast.lane.b32.xlu0 %v1203, %s1208
    %v1210 = vpop.permute.xlu0 %1209
    %s1212 = sor.u32 256, 16
    %1213 = vbcast.lane.b32.xlu0 %v1203, %s1212
    %v1214 = vpop.permute.xlu0 %1213
    %s1216 = sor.u32 256, 24
    %1217 = vbcast.lane.b32.xlu0 %v1203, %s1216
    %v1218 = vpop.permute.xlu0 %1217
    %v1219 = vlaneseq
    %v1220 = vshrl.u32 %v1219, 7
    %v1221 = vsub.s32 1, %v1220
    %v1222 = vrot.slane %v556, %v1221
    %1224 = vbcast.lane.b32.xlu0 %v1222, 256
    %v1225 = vpop.permute.xlu0 %1224
    %s1227 = sor.u32 256, 8
    %1228 = vbcast.lane.b32.xlu0 %v1222, %s1227
    %v1229 = vpop.permute.xlu0 %1228
    %s1231 = sor.u32 256, 16
    %1232 = vbcast.lane.b32.xlu0 %v1222, %s1231
    %v1233 = vpop.permute.xlu0 %1232
    %s1235 = sor.u32 256, 24
    %1236 = vbcast.lane.b32.xlu0 %v1222, %s1235
    %v1237 = vpop.permute.xlu0 %1236
    %v1238 = vlaneseq
    %v1239 = vshrl.u32 %v1238, 7
    %v1240 = vsub.s32 2, %v1239
    %v1241 = vrot.slane %v556, %v1240
    %1243 = vbcast.lane.b32.xlu0 %v1241, 256
    %v1244 = vpop.permute.xlu0 %1243
    %s1246 = sor.u32 256, 8
    %1247 = vbcast.lane.b32.xlu0 %v1241, %s1246
    %v1248 = vpop.permute.xlu0 %1247
    %s1250 = sor.u32 256, 16
    %1251 = vbcast.lane.b32.xlu0 %v1241, %s1250
    %v1252 = vpop.permute.xlu0 %1251
    %s1254 = sor.u32 256, 24
    %1255 = vbcast.lane.b32.xlu0 %v1241, %s1254
    %v1256 = vpop.permute.xlu0 %1255
    %v1257 = vlaneseq
    %v1258 = vshrl.u32 %v1257, 7
    %v1259 = vsub.s32 3, %v1258
    %v1260 = vrot.slane %v556, %v1259
    %1262 = vbcast.lane.b32.xlu0 %v1260, 256
    %v1263 = vpop.permute.xlu0 %1262
    %s1265 = sor.u32 256, 8
    %1266 = vbcast.lane.b32.xlu0 %v1260, %s1265
    %v1267 = vpop.permute.xlu0 %1266
    %s1269 = sor.u32 256, 16
    %1270 = vbcast.lane.b32.xlu0 %v1260, %s1269
    %v1271 = vpop.permute.xlu0 %1270
    %s1273 = sor.u32 256, 24
    %1274 = vbcast.lane.b32.xlu0 %v1260, %s1273
    %v1275 = vpop.permute.xlu0 %1274
    %v1276 = vlaneseq
    %v1277 = vshrl.u32 %v1276, 7
    %v1278 = vsub.s32 4, %v1277
    %v1279 = vrot.slane %v556, %v1278
    %1281 = vbcast.lane.b32.xlu0 %v1279, 256
    %v1282 = vpop.permute.xlu0 %1281
    %s1284 = sor.u32 256, 8
    %1285 = vbcast.lane.b32.xlu0 %v1279, %s1284
    %v1286 = vpop.permute.xlu0 %1285
    %s1288 = sor.u32 256, 16
    %1289 = vbcast.lane.b32.xlu0 %v1279, %s1288
    %v1290 = vpop.permute.xlu0 %1289
    %s1292 = sor.u32 256, 24
    %1293 = vbcast.lane.b32.xlu0 %v1279, %s1292
    %v1294 = vpop.permute.xlu0 %1293
    %v1295 = vlaneseq
    %v1296 = vshrl.u32 %v1295, 7
    %v1297 = vsub.s32 5, %v1296
    %v1298 = vrot.slane %v556, %v1297
    %1300 = vbcast.lane.b32.xlu0 %v1298, 256
    %v1301 = vpop.permute.xlu0 %1300
    %s1303 = sor.u32 256, 8
    %1304 = vbcast.lane.b32.xlu0 %v1298, %s1303
    %v1305 = vpop.permute.xlu0 %1304
    %s1307 = sor.u32 256, 16
    %1308 = vbcast.lane.b32.xlu0 %v1298, %s1307
    %v1309 = vpop.permute.xlu0 %1308
    %s1311 = sor.u32 256, 24
    %1312 = vbcast.lane.b32.xlu0 %v1298, %s1311
    %v1313 = vpop.permute.xlu0 %1312
    %v1314 = vlaneseq
    %v1315 = vshrl.u32 %v1314, 7
    %v1316 = vsub.s32 6, %v1315
    %v1317 = vrot.slane %v556, %v1316
    %1319 = vbcast.lane.b32.xlu0 %v1317, 256
    %v1320 = vpop.permute.xlu0 %1319
    %s1322 = sor.u32 256, 8
    %1323 = vbcast.lane.b32.xlu0 %v1317, %s1322
    %v1324 = vpop.permute.xlu0 %1323
    %s1326 = sor.u32 256, 16
    %1327 = vbcast.lane.b32.xlu0 %v1317, %s1326
    %v1328 = vpop.permute.xlu0 %1327
    %s1330 = sor.u32 256, 24
    %1331 = vbcast.lane.b32.xlu0 %v1317, %s1330
    %v1332 = vpop.permute.xlu0 %1331
    %v1333 = vlaneseq
    %v1334 = vshrl.u32 %v1333, 7
    %v1335 = vsub.s32 7, %v1334
    %v1336 = vrot.slane %v556, %v1335
    %1338 = vbcast.lane.b32.xlu0 %v1336, 256
    %v1339 = vpop.permute.xlu0 %1338
    %s1341 = sor.u32 256, 8
    %1342 = vbcast.lane.b32.xlu0 %v1336, %s1341
    %v1343 = vpop.permute.xlu0 %1342
    %s1345 = sor.u32 256, 16
    %1346 = vbcast.lane.b32.xlu0 %v1336, %s1345
    %v1347 = vpop.permute.xlu0 %1346
    %s1349 = sor.u32 256, 24
    %1350 = vbcast.lane.b32.xlu0 %v1336, %s1349
    %v1351 = vpop.permute.xlu0 %1350
    %v1353 = vcombine.high %v1199, %v1199
    %v1355 = vunpack.c.l.s4 1966171168
    %v1356 = vunpack.c.0.s8 %v1355
    %v1357 = vlaneseq
    %v1358 = vshrl.u32 %v1357, 7
    %v1359 = vsub.s32 %v1356, %v1358
    %v1360 = vrot.slane %v1199, %v1359
    %v1362 = vunpack.c.l.s4 1966171168
    %v1363 = vunpack.c.0.s8 %v1362
    %v1364 = vlaneseq
    %v1365 = vshrl.u32 %v1364, 7
    %v1366 = vsub.s32 %v1363, %v1365
    %v1367 = vrot.slane %v1353, %v1366
    %v1368 = vcombine.high %v1360, %v1360
    %v1369 = vcombine.high %v1367, %v1367
    %v1371 = vunpack.c.l.s4 1966171168
    %v1372 = vunpack.c.0.s8 %v1371
    %v1373 = vlaneseq
    %v1374 = vshrl.u32 %v1373, 7
    %v1375 = vsub.s32 %v1372, %v1374
    %v1376 = vrot.slane %v1360, %v1375
    %v1378 = vunpack.c.l.s4 1966171168
    %v1379 = vunpack.c.0.s8 %v1378
    %v1380 = vlaneseq
    %v1381 = vshrl.u32 %v1380, 7
    %v1382 = vsub.s32 %v1379, %v1381
    %v1383 = vrot.slane %v1367, %v1382
    %v1385 = vunpack.c.l.s4 1966171168
    %v1386 = vunpack.c.0.s8 %v1385
    %v1387 = vlaneseq
    %v1388 = vshrl.u32 %v1387, 7
    %v1389 = vsub.s32 %v1386, %v1388
    %v1390 = vrot.slane %v1368, %v1389
    %v1392 = vunpack.c.l.s4 1966171168
    %v1393 = vunpack.c.0.s8 %v1392
    %v1394 = vlaneseq
    %v1395 = vshrl.u32 %v1394, 7
    %v1396 = vsub.s32 %v1393, %v1395
    %v1397 = vrot.slane %v1369, %v1396
    %v1398 = vcombine.high %v1376, %v1376
    %v1399 = vcombine.high %v1383, %v1383
    %v1400 = vcombine.high %v1390, %v1390
    %v1401 = vcombine.high %v1397, %v1397
    %v1402 = vlaneseq
    %v1403 = vshrl.u32 %v1402, 7
    %v1404 = vsub.s32 0, %v1403
    %v1405 = vrot.slane %v1376, %v1404
    %v1406 = vlaneseq
    %v1407 = vshrl.u32 %v1406, 7
    %v1408 = vsub.s32 0, %v1407
    %v1409 = vrot.slane %v1390, %v1408
    %v1410 = vlaneseq
    %v1411 = vshrl.u32 %v1410, 7
    %v1412 = vsub.s32 0, %v1411
    %v1413 = vrot.slane %v1398, %v1412
    %v1414 = vlaneseq
    %v1415 = vshrl.u32 %v1414, 7
    %v1416 = vsub.s32 0, %v1415
    %v1417 = vrot.slane %v1400, %v1416
    %v1418 = vlaneseq
    %v1419 = vshrl.u32 %v1418, 7
    %v1420 = vsub.s32 0, %v1419
    %v1421 = vrot.slane %v1383, %v1420
    %v1422 = vlaneseq
    %v1423 = vshrl.u32 %v1422, 7
    %v1424 = vsub.s32 0, %v1423
    %v1425 = vrot.slane %v1397, %v1424
    %v1426 = vlaneseq
    %v1427 = vshrl.u32 %v1426, 7
    %v1428 = vsub.s32 0, %v1427
    %v1429 = vrot.slane %v1399, %v1428
    %v1430 = vlaneseq
    %v1431 = vshrl.u32 %v1430, 7
    %v1432 = vsub.s32 0, %v1431
    %v1433 = vrot.slane %v1401, %v1432
    %v1442 = vadd.f32 %v1206, %v1405
    %v1443 = vadd.f32 %v1210, %v1405
    %v1444 = vadd.f32 %v1214, %v1405
    %v1445 = vadd.f32 %v1218, %v1405
    %v1446 = vadd.f32 %v1225, %v1409
    %v1447 = vadd.f32 %v1229, %v1409
    %v1448 = vadd.f32 %v1233, %v1409
    %v1449 = vadd.f32 %v1237, %v1409
    %v1450 = vadd.f32 %v1244, %v1413
    %v1451 = vadd.f32 %v1248, %v1413
    %v1452 = vadd.f32 %v1252, %v1413
    %v1453 = vadd.f32 %v1256, %v1413
    %v1454 = vadd.f32 %v1263, %v1417
    %v1455 = vadd.f32 %v1267, %v1417
    %v1456 = vadd.f32 %v1271, %v1417
    %v1457 = vadd.f32 %v1275, %v1417
    %v1458 = vadd.f32 %v1282, %v1421
    %v1459 = vadd.f32 %v1286, %v1421
    %v1460 = vadd.f32 %v1290, %v1421
    %v1461 = vadd.f32 %v1294, %v1421
    %v1462 = vadd.f32 %v1301, %v1425
    %v1463 = vadd.f32 %v1305, %v1425
    %v1464 = vadd.f32 %v1309, %v1425
    %v1465 = vadd.f32 %v1313, %v1425
    %v1466 = vadd.f32 %v1320, %v1429
    %v1467 = vadd.f32 %v1324, %v1429
    %v1468 = vadd.f32 %v1328, %v1429
    %v1469 = vadd.f32 %v1332, %v1429
    %v1470 = vadd.f32 %v1339, %v1433
    %v1471 = vadd.f32 %v1343, %v1433
    %v1472 = vadd.f32 %v1347, %v1433
    %v1473 = vadd.f32 %v1351, %v1433
    %v1474 = vmul.f32 %v45, %v1442
    %v1475 = vmul.f32 %v46, %v1443
    %v1476 = vmul.f32 %v47, %v1444
    %v1477 = vmul.f32 %v48, %v1445
    %v1478 = vmul.f32 %v49, %v1446
    %v1479 = vmul.f32 %v50, %v1447
    %v1480 = vmul.f32 %v51, %v1448
    %v1481 = vmul.f32 %v52, %v1449
    %v1482 = vmul.f32 %v53, %v1450
    %v1483 = vmul.f32 %v54, %v1451
    %v1484 = vmul.f32 %v55, %v1452
    %v1485 = vmul.f32 %v56, %v1453
    %v1486 = vmul.f32 %v57, %v1454
    %v1487 = vmul.f32 %v58, %v1455
    %v1488 = vmul.f32 %v59, %v1456
    %v1489 = vmul.f32 %v60, %v1457
    %v1490 = vmul.f32 %v61, %v1458
    %v1491 = vmul.f32 %v62, %v1459
    %v1492 = vmul.f32 %v63, %v1460
    %v1493 = vmul.f32 %v64, %v1461
    %v1494 = vmul.f32 %v65, %v1462
    %v1495 = vmul.f32 %v66, %v1463
    %v1496 = vmul.f32 %v67, %v1464
    %v1497 = vmul.f32 %v68, %v1465
    %v1498 = vmul.f32 %v69, %v1466
    %v1499 = vmul.f32 %v70, %v1467
    %v1500 = vmul.f32 %v71, %v1468
    %v1501 = vmul.f32 %v72, %v1469
    %v1502 = vmul.f32 %v73, %v1470
    %v1503 = vmul.f32 %v74, %v1471
    %v1504 = vmul.f32 %v75, %v1472
    %v1505 = vmul.f32 %v76, %v1473
    %1506 = vst [vmem:[#allocation6] sm:$0xff] %v1474
    %1507 = vst [vmem:[#allocation6 + $0x8] sm:$0xff] %v1475
    %1508 = vst [vmem:[#allocation6 + $0x10] sm:$0xff] %v1476
    %1509 = vst [vmem:[#allocation6 + $0x18] sm:$0xff] %v1477
    %1510 = vst [vmem:[#allocation6 + $0x20] sm:$0xff] %v1478
    %1511 = vst [vmem:[#allocation6 + $0x28] sm:$0xff] %v1479
    %1512 = vst [vmem:[#allocation6 + $0x30] sm:$0xff] %v1480
    %1513 = vst [vmem:[#allocation6 + $0x38] sm:$0xff] %v1481
    %1514 = vst [vmem:[#allocation6 + $0x40] sm:$0xff] %v1482
    %1515 = vst [vmem:[#allocation6 + $0x48] sm:$0xff] %v1483
    %1516 = vst [vmem:[#allocation6 + $0x50] sm:$0xff] %v1484
    %1517 = vst [vmem:[#allocation6 + $0x58] sm:$0xff] %v1485
    %1518 = vst [vmem:[#allocation6 + $0x60] sm:$0xff] %v1486
    %1519 = vst [vmem:[#allocation6 + $0x68] sm:$0xff] %v1487
    %1520 = vst [vmem:[#allocation6 + $0x70] sm:$0xff] %v1488
    %1521 = vst [vmem:[#allocation6 + $0x78] sm:$0xff] %v1489
    %1522 = vst [vmem:[#allocation6 + $0x80] sm:$0xff] %v1490
    %1523 = vst [vmem:[#allocation6 + $0x88] sm:$0xff] %v1491
    %1524 = vst [vmem:[#allocation6 + $0x90] sm:$0xff] %v1492
    %1525 = vst [vmem:[#allocation6 + $0x98] sm:$0xff] %v1493
    %1526 = vst [vmem:[#allocation6 + $0xa0] sm:$0xff] %v1494
    %1527 = vst [vmem:[#allocation6 + $0xa8] sm:$0xff] %v1495
    %1528 = vst [vmem:[#allocation6 + $0xb0] sm:$0xff] %v1496
    %1529 = vst [vmem:[#allocation6 + $0xb8] sm:$0xff] %v1497
    %1530 = vst [vmem:[#allocation6 + $0xc0] sm:$0xff] %v1498
    %1531 = vst [vmem:[#allocation6 + $0xc8] sm:$0xff] %v1499
    %1532 = vst [vmem:[#allocation6 + $0xd0] sm:$0xff] %v1500
    %1533 = vst [vmem:[#allocation6 + $0xd8] sm:$0xff] %v1501
    %1534 = vst [vmem:[#allocation6 + $0xe0] sm:$0xff] %v1502
    %1535 = vst [vmem:[#allocation6 + $0xe8] sm:$0xff] %v1503
    %1536 = vst [vmem:[#allocation6 + $0xf0] sm:$0xff] %v1504
    %1537 = vst [vmem:[#allocation6 + $0xf8] sm:$0xff] %v1505
    // Predicated region
    $region38: #{tpu_custom_call.1} parent=1 // pred_check
      _
    $region39: #{tpu_custom_call.1} parent=1 // pred_check_branch
      %1539 = sbr.rel (0) target = $region41
    $region40: #{tpu_custom_call.1} parent=1 // pred_region
      %s1541 = ssub.s32 4096, 4096
      %1542 = vsyncadd [#allocation5], %s1541
      %s1543 = sshll.u32 [#allocation6], 4
      %s1544 = int_to_ptr.vmem [resolvable:$true] %s1543
      %1549 = dma.vmem_to_hbm [thread:$0]  %s1544, 4096, %s8, [#allocation5], 128, 128, 8
    $region41: #{tpu_custom_call.1} parent=1 // pred_fallthru
      _
    // Predicated region
    $region42: #{tpu_custom_call.1} parent=1 // pred_check
      _
    $region43: #{tpu_custom_call.1} parent=1 // pred_check_branch
      %1551 = sbr.rel (0) target = $region45
    $region44: #{tpu_custom_call.1} parent=1 // pred_region
      %1552 = dma.done [#allocation5], 4096
    $region45: #{tpu_custom_call.1} parent=1 // pred_fallthru
      _
    %1553 = vsyncpa [#allocation4], 1
    %1554 = vsyncpa [#allocation5], 1

</llo_original>
